<compile_context>
chip_gen: v5e
topology: v5e:2x2
jax: 0.10.0
libtpu: 0.0.40
codegen_flags: <defaults>
</compile_context>

<pallas_src>
import jax
import jax.numpy as jnp
from jax.experimental import pallas as pl
from jax.experimental.pallas import tpu as pltpu

LANES = 128
_VMEM_LIMIT = 32 * 1024 * 1024   # fits v5e/v6e/v7x scoped-VMEM budgets


def _round_up(x, m):
    return (x + m - 1) // m * m


# ---------------------------------------------------------------------------
# Kernel 1: fused conv (im2col matmul) + bias + ReLU + 2x2 max-pool.
# grid = (m_tiles, 4); axis 0 is parallel over row tiles, axis 1 is the
# pooling-window corner (reduction): the pooled output block stays resident in
# VMEM and is max-accumulated across the 4 corners.
# ---------------------------------------------------------------------------
def _conv_pool_kernel(a_ref, w_ref, b_ref, o_ref):
    c = pl.program_id(1)
    y = jnp.dot(a_ref[...], w_ref[...], preferred_element_type=jnp.float32)
    y = jnp.maximum(y + b_ref[...], 0.0)          # bias + ReLU in f32

    @pl.when(c == 0)
    def _():
        o_ref[...] = y

    @pl.when(c != 0)
    def _():
        o_ref[...] = jnp.maximum(o_ref[...], y)   # 2x2 max-pool accumulation


def conv_relu_pool(x_nhwc, w_prep, b_prep, *, ksize, cout, tile_m=512):
    """valid conv (stride 1) + ReLU + 2x2 max-pool, fused in one Pallas kernel.

    w_prep: (K*K*Cin, 128) bf16, lane-padded; b_prep: (1, 128) f32, lane-padded.
    """
    B, H, W, Cin = x_nhwc.shape
    Ho, Wo = H - ksize + 1, W - ksize + 1
    assert Ho % 2 == 0 and Wo % 2 == 0
    Hp, Wp = Ho // 2, Wo // 2
    KKC = ksize * ksize * Cin
    assert w_prep.shape == (KKC, LANES)

    # im2col in pool-corner-major layout: cols[c, m, k] is the conv patch of
    # output pixel (2*ph + c//2, 2*pw + c%2) for m = (b*Hp + ph)*Wp + pw,
    # column k = (kh*K + kw)*Cin + ci (matches the weight reorder below).
    taps = []
    for kh in range(ksize):
        for kw in range(ksize):
            taps.append(x_nhwc[:, kh:kh + Ho, kw:kw + Wo, :])
    p = jnp.stack(taps, axis=3)                       # (B, Ho, Wo, K*K, Cin)
    p = p.reshape(B, Hp, 2, Wp, 2, KKC)
    p = jnp.transpose(p, (2, 4, 0, 1, 3, 5))          # (2, 2, B, Hp, Wp, KKC)
    Mp = B * Hp * Wp
    cols = p.reshape(4, Mp, KKC).astype(jnp.bfloat16)

    tm = min(tile_m, _round_up(Mp, 16))               # bf16 sublane packing
    Mp_pad = _round_up(Mp, tm)
    if Mp_pad != Mp:
        cols = jnp.pad(cols, ((0, 0), (0, Mp_pad - Mp), (0, 0)))

    cost = pl.CostEstimate(
        flops=2 * 4 * Mp_pad * KKC * LANES,
        transcendentals=0,
        bytes_accessed=(cols.size * cols.dtype.itemsize
                        + w_prep.size * w_prep.dtype.itemsize
                        + b_prep.size * 4
                        + Mp_pad * LANES * 4),
    )

    out = pl.pallas_call(
        _conv_pool_kernel,
        out_shape=jax.ShapeDtypeStruct((Mp_pad, LANES), jnp.float32),
        grid=(Mp_pad // tm, 4),
        in_specs=[
            pl.BlockSpec((None, tm, KKC), lambda i, c: (c, i, 0)),
            pl.BlockSpec((KKC, LANES), lambda i, c: (0, 0)),
            pl.BlockSpec((1, LANES), lambda i, c: (0, 0)),
        ],
        out_specs=pl.BlockSpec((tm, LANES), lambda i, c: (i, 0)),
        compiler_params=pltpu.CompilerParams(
            dimension_semantics=("parallel", "arbitrary"),
            vmem_limit_bytes=_VMEM_LIMIT,
        ),
        cost_estimate=cost,
    )(cols, w_prep, b_prep)

    return out[:Mp, :cout].reshape(B, Hp, Wp, cout)


# ---------------------------------------------------------------------------
# Kernel 2: fused fc1 -> ReLU -> fc2 -> ReLU -> fc3 (all weights resident).
# ---------------------------------------------------------------------------
def _fc_stack_kernel(x_ref, w1_ref, b1_ref, w2_ref, b2_ref, w3_ref, b3_ref,
                     o_ref):
    h = jnp.dot(x_ref[...], w1_ref[...], preferred_element_type=jnp.float32)
    h = jnp.maximum(h + b1_ref[...], 0.0)
    h = jnp.dot(h.astype(jnp.bfloat16), w2_ref[...],
                preferred_element_type=jnp.float32)
    h = jnp.maximum(h + b2_ref[...], 0.0)
    h = jnp.dot(h.astype(jnp.bfloat16), w3_ref[...],
                preferred_element_type=jnp.float32)
    o_ref[...] = (h + b3_ref[...]).astype(o_ref.dtype)


def fc_stack(x, w1, b1, w2, b2, w3, b3, *, tile_b=256):
    B, K1 = x.shape
    tb = min(tile_b, _round_up(B, 16))
    B_pad = _round_up(B, tb)
    xp = x.astype(jnp.bfloat16)
    if B_pad != B:
        xp = jnp.pad(xp, ((0, B_pad - B), (0, 0)))

    return pl.pallas_call(
        _fc_stack_kernel,
        out_shape=jax.ShapeDtypeStruct((B_pad, LANES), jnp.float32),
        grid=(B_pad // tb,),
        in_specs=[
            pl.BlockSpec((tb, K1), lambda i: (i, 0)),
            pl.BlockSpec(w1.shape, lambda i: (0, 0)),
            pl.BlockSpec(b1.shape, lambda i: (0, 0)),
            pl.BlockSpec(w2.shape, lambda i: (0, 0)),
            pl.BlockSpec(b2.shape, lambda i: (0, 0)),
            pl.BlockSpec(w3.shape, lambda i: (0, 0)),
            pl.BlockSpec(b3.shape, lambda i: (0, 0)),
        ],
        out_specs=pl.BlockSpec((tb, LANES), lambda i: (i, 0)),
        compiler_params=pltpu.CompilerParams(
            dimension_semantics=("parallel",),
            vmem_limit_bytes=_VMEM_LIMIT,
        ),
    )(xp, w1, b1, w2, b2, w3, b3)


# ---------------------------------------------------------------------------
# Parameters
# ---------------------------------------------------------------------------
def init_params(key):
    def uniform(k, shape, fan_in):
        bound = 1.0 / (fan_in ** 0.5)
        return jax.random.uniform(k, shape, jnp.float32, -bound, bound)

    ks = jax.random.split(key, 10)
    return {
        "conv1_w": uniform(ks[0], (6, 1, 5, 5), 1 * 5 * 5),
        "conv1_b": uniform(ks[1], (6,), 1 * 5 * 5),
        "conv2_w": uniform(ks[2], (16, 6, 5, 5), 6 * 5 * 5),
        "conv2_b": uniform(ks[3], (16,), 6 * 5 * 5),
        "fc1_w": uniform(ks[4], (120, 16 * 5 * 5), 16 * 5 * 5),
        "fc1_b": uniform(ks[5], (120,), 16 * 5 * 5),
        "fc2_w": uniform(ks[6], (84, 120), 120),
        "fc2_b": uniform(ks[7], (84,), 120),
        "fc3_w": uniform(ks[8], (10, 84), 84),
        "fc3_b": uniform(ks[9], (10,), 84),
    }


def _prep_conv_w(w_oihw):
    """(Cout,Cin,K,K) -> ((kh,kw,ci) flattened, 128) bf16, lane-padded."""
    Cout, Cin, K, _ = w_oihw.shape
    w2 = jnp.transpose(w_oihw, (2, 3, 1, 0)).reshape(K * K * Cin, Cout)
    return jnp.pad(w2, ((0, 0), (0, LANES - Cout))).astype(jnp.bfloat16)


def _prep_fc_w(w, k_pad):
    """PyTorch (out,in) -> (k_pad, 128) bf16, zero-padded, pre-transposed."""
    out_f, in_f = w.shape
    return jnp.pad(w.T, ((0, k_pad - in_f), (0, LANES - out_f))).astype(
        jnp.bfloat16)


def _prep_bias(b):
    return jnp.pad(b, (0, LANES - b.shape[0])).reshape(1, LANES).astype(
        jnp.float32)


def prepare_params(p):
    """One-time weight transpose / lane-padding / bf16 cast (done outside jit)."""
    return {
        "conv1_w": _prep_conv_w(p["conv1_w"]), "conv1_b": _prep_bias(p["conv1_b"]),
        "conv2_w": _prep_conv_w(p["conv2_w"]), "conv2_b": _prep_bias(p["conv2_b"]),
        "fc1_w": _prep_fc_w(p["fc1_w"], 16 * 5 * 5), "fc1_b": _prep_bias(p["fc1_b"]),
        "fc2_w": _prep_fc_w(p["fc2_w"], LANES), "fc2_b": _prep_bias(p["fc2_b"]),
        "fc3_w": _prep_fc_w(p["fc3_w"], LANES), "fc3_b": _prep_bias(p["fc3_b"]),
    }


# ---------------------------------------------------------------------------
# Forward pass (matches PyTorch Net.forward semantics)
# ---------------------------------------------------------------------------
def net_forward(prep, x_nchw):
    B = x_nchw.shape[0]
    x = jnp.transpose(x_nchw, (0, 2, 3, 1))                              # NCHW->NHWC
    x = conv_relu_pool(x, prep["conv1_w"], prep["conv1_b"], ksize=5, cout=6)   # (B,14,14,6)
    x = conv_relu_pool(x, prep["conv2_w"], prep["conv2_b"], ksize=5, cout=16)  # (B,5,5,16)
    # match PyTorch x.view(-1, 16*5*5): flatten in (C, H, W) order
    x = jnp.transpose(x, (0, 3, 1, 2)).reshape(B, 16 * 5 * 5)
    out = fc_stack(x, prep["fc1_w"], prep["fc1_b"],
                   prep["fc2_w"], prep["fc2_b"],
                   prep["fc3_w"], prep["fc3_b"])                         # (B_pad,128)
    return out[:B, :10]


if __name__ == "__main__":
    key = jax.random.PRNGKey(0)
    pkey, xkey = jax.random.split(key)
    params = init_params(pkey)
    prep = prepare_params(params)          # pre-transposed / padded once
    # Net's fc1 (16*5*5) implies 32x32 single-channel input
    x = jax.random.normal(xkey, (2, 1, 32, 32), jnp.float32)
    out = jax.jit(net_forward)(prep, x)
    out = jax.block_until_ready(out)
    assert out.shape == (2, 10) and out.dtype == jnp.float32
    print("KERNEL_OK")
</pallas_src>

<mosaic_0001>
module attributes {stable_mosaic.version = 11 : i64} {
  func.func @_conv_pool_kernel(%arg0: i32, %arg1: i32, %arg2: memref<1x400x25xbf16, #tpu.memory_space<vmem>>, %arg3: memref<25x128xbf16, #tpu.memory_space<vmem>>, %arg4: memref<1x128xf32, #tpu.memory_space<vmem>>, %arg5: memref<400x128xf32, #tpu.memory_space<vmem>>) attributes {dimension_semantics = [#tpu.dimension_semantics<parallel>, #tpu.dimension_semantics<arbitrary>], iteration_bounds = array<i64: 1, 4>, scalar_prefetch = 0 : i64, scratch_operands = 0 : i64, tpu.core_type = #tpu.core_type<tc>, window_params = [{transform_indices = @transform_0, window_bounds = array<i64: 1, 400, 25>}, {pipeline_mode = #tpu.pipeline_mode<synchronous>, transform_indices = @transform_1, window_bounds = array<i64: 25, 128>}, {pipeline_mode = #tpu.pipeline_mode<synchronous>, transform_indices = @transform_2, window_bounds = array<i64: 1, 128>}, {transform_indices = @transform_3, window_bounds = array<i64: 400, 128>}]} {
    %c0 = arith.constant 0 : index
    %c0_0 = arith.constant 0 : index
    %c0_1 = arith.constant 0 : index
    %0 = vector.load %arg2[%c0, %c0_0, %c0_1] : memref<1x400x25xbf16, #tpu.memory_space<vmem>>, vector<1x400x25xbf16>
    %1 = vector.shape_cast %0 : vector<1x400x25xbf16> to vector<400x25xbf16>
    %c0_2 = arith.constant 0 : index
    %c0_3 = arith.constant 0 : index
    %2 = vector.load %arg3[%c0_2, %c0_3] : memref<25x128xbf16, #tpu.memory_space<vmem>>, vector<25x128xbf16>
    %cst = arith.constant dense<0.000000e+00> : vector<400x128xf32>
    %3 = tpu.matmul %1, %2, %cst {dimension_numbers = #tpu.dot_dimension_numbers<[1], [0], [0], [1], [0, 0, 1, 1], [], []>} : vector<400x25xbf16>, vector<25x128xbf16>, vector<400x128xf32> -> vector<400x128xf32>
    %c0_4 = arith.constant 0 : index
    %c0_5 = arith.constant 0 : index
    %4 = vector.load %arg4[%c0_4, %c0_5] : memref<1x128xf32, #tpu.memory_space<vmem>>, vector<1x128xf32>
    %5 = vector.broadcast %4 : vector<1x128xf32> to vector<400x128xf32>
    %6 = arith.addf %3, %5 : vector<400x128xf32>
    %cst_6 = arith.constant 0.000000e+00 : f32
    %7 = vector.broadcast %cst_6 : f32 to vector<400x128xf32>
    %8 = arith.maximumf %6, %7 : vector<400x128xf32>
    %c0_i32 = arith.constant 0 : i32
    %9 = arith.cmpi eq, %arg1, %c0_i32 : i32
    %10 = arith.extui %9 : i1 to i32
    %c0_i32_7 = arith.constant 0 : i32
    %11 = arith.cmpi ne, %10, %c0_i32_7 : i32
    scf.if %11 {
      %c0_10 = arith.constant 0 : index
      %c0_11 = arith.constant 0 : index
      %15 = vector.load %arg5[%c0_10, %c0_11] : memref<400x128xf32, #tpu.memory_space<vmem>>, vector<400x128xf32>
      tpu.vector_store %arg5[%c0_10, %c0_11], %8 {strides = array<i32>} : memref<400x128xf32, #tpu.memory_space<vmem>>, vector<400x128xf32>,
    } else {
    }
    %c0_i32_8 = arith.constant 0 : i32
    %12 = arith.cmpi ne, %arg1, %c0_i32_8 : i32
    %13 = arith.extui %12 : i1 to i32
    %c0_i32_9 = arith.constant 0 : i32
    %14 = arith.cmpi ne, %13, %c0_i32_9 : i32
    scf.if %14 {
      %c0_10 = arith.constant 0 : index
      %c0_11 = arith.constant 0 : index
      %15 = vector.load %arg5[%c0_10, %c0_11] : memref<400x128xf32, #tpu.memory_space<vmem>>, vector<400x128xf32>
      %16 = arith.maximumf %15, %8 : vector<400x128xf32>
      %c0_12 = arith.constant 0 : index
      %c0_13 = arith.constant 0 : index
      %17 = vector.load %arg5[%c0_12, %c0_13] : memref<400x128xf32, #tpu.memory_space<vmem>>, vector<400x128xf32>
      tpu.vector_store %arg5[%c0_12, %c0_13], %16 {strides = array<i32>} : memref<400x128xf32, #tpu.memory_space<vmem>>, vector<400x128xf32>,
    } else {
    }
    return
  }
  func.func @transform_0(%arg0: i32, %arg1: i32) -> (i32, i32, i32) {
    %c0_i32 = arith.constant 0 : i32
    %c0_i32_0 = arith.constant 0 : i32
    return %arg1, %arg0, %c0_i32 : i32, i32, i32
  }
  func.func @transform_1(%arg0: i32, %arg1: i32) -> (i32, i32) {
    %c0_i32 = arith.constant 0 : i32
    %c0_i32_0 = arith.constant 0 : i32
    %c0_i32_1 = arith.constant 0 : i32
    return %c0_i32, %c0_i32_0 : i32, i32
  }
  func.func @transform_2(%arg0: i32, %arg1: i32) -> (i32, i32) {
    %c0_i32 = arith.constant 0 : i32
    %c0_i32_0 = arith.constant 0 : i32
    %c0_i32_1 = arith.constant 0 : i32
    return %c0_i32, %c0_i32_0 : i32, i32
  }
  func.func @transform_3(%arg0: i32, %arg1: i32) -> (i32, i32) {
    %c0_i32 = arith.constant 0 : i32
    %c0_i32_0 = arith.constant 0 : i32
    return %arg0, %c0_i32 : i32, i32
  }
}

module attributes {stable_mosaic.version = 11 : i64} {
  func.func @_conv_pool_kernel(%arg0: i32, %arg1: i32, %arg2: memref<1x64x150xbf16, #tpu.memory_space<vmem>>, %arg3: memref<150x128xbf16, #tpu.memory_space<vmem>>, %arg4: memref<1x128xf32, #tpu.memory_space<vmem>>, %arg5: memref<64x128xf32, #tpu.memory_space<vmem>>) attributes {dimension_semantics = [#tpu.dimension_semantics<parallel>, #tpu.dimension_semantics<arbitrary>], iteration_bounds = array<i64: 1, 4>, scalar_prefetch = 0 : i64, scratch_operands = 0 : i64, tpu.core_type = #tpu.core_type<tc>, window_params = [{transform_indices = @transform_0, window_bounds = array<i64: 1, 64, 150>}, {pipeline_mode = #tpu.pipeline_mode<synchronous>, transform_indices = @transform_1, window_bounds = array<i64: 150, 128>}, {pipeline_mode = #tpu.pipeline_mode<synchronous>, transform_indices = @transform_2, window_bounds = array<i64: 1, 128>}, {transform_indices = @transform_3, window_bounds = array<i64: 64, 128>}]} {
    %c0 = arith.constant 0 : index
    %c0_0 = arith.constant 0 : index
    %c0_1 = arith.constant 0 : index
    %0 = vector.load %arg2[%c0, %c0_0, %c0_1] : memref<1x64x150xbf16, #tpu.memory_space<vmem>>, vector<1x64x150xbf16>
    %1 = vector.shape_cast %0 : vector<1x64x150xbf16> to vector<64x150xbf16>
    %c0_2 = arith.constant 0 : index
    %c0_3 = arith.constant 0 : index
    %2 = vector.load %arg3[%c0_2, %c0_3] : memref<150x128xbf16, #tpu.memory_space<vmem>>, vector<150x128xbf16>
    %cst = arith.constant dense<0.000000e+00> : vector<64x128xf32>
    %3 = tpu.matmul %1, %2, %cst {dimension_numbers = #tpu.dot_dimension_numbers<[1], [0], [0], [1], [0, 0, 1, 1], [], []>} : vector<64x150xbf16>, vector<150x128xbf16>, vector<64x128xf32> -> vector<64x128xf32>
    %c0_4 = arith.constant 0 : index
    %c0_5 = arith.constant 0 : index
    %4 = vector.load %arg4[%c0_4, %c0_5] : memref<1x128xf32, #tpu.memory_space<vmem>>, vector<1x128xf32>
    %5 = vector.broadcast %4 : vector<1x128xf32> to vector<64x128xf32>
    %6 = arith.addf %3, %5 : vector<64x128xf32>
    %cst_6 = arith.constant 0.000000e+00 : f32
    %7 = vector.broadcast %cst_6 : f32 to vector<64x128xf32>
    %8 = arith.maximumf %6, %7 : vector<64x128xf32>
    %c0_i32 = arith.constant 0 : i32
    %9 = arith.cmpi eq, %arg1, %c0_i32 : i32
    %10 = arith.extui %9 : i1 to i32
    %c0_i32_7 = arith.constant 0 : i32
    %11 = arith.cmpi ne, %10, %c0_i32_7 : i32
    scf.if %11 {
      %c0_10 = arith.constant 0 : index
      %c0_11 = arith.constant 0 : index
      %15 = vector.load %arg5[%c0_10, %c0_11] : memref<64x128xf32, #tpu.memory_space<vmem>>, vector<64x128xf32>
      tpu.vector_store %arg5[%c0_10, %c0_11], %8 {strides = array<i32>} : memref<64x128xf32, #tpu.memory_space<vmem>>, vector<64x128xf32>,
    } else {
    }
    %c0_i32_8 = arith.constant 0 : i32
    %12 = arith.cmpi ne, %arg1, %c0_i32_8 : i32
    %13 = arith.extui %12 : i1 to i32
    %c0_i32_9 = arith.constant 0 : i32
    %14 = arith.cmpi ne, %13, %c0_i32_9 : i32
    scf.if %14 {
      %c0_10 = arith.constant 0 : index
      %c0_11 = arith.constant 0 : index
      %15 = vector.load %arg5[%c0_10, %c0_11] : memref<64x128xf32, #tpu.memory_space<vmem>>, vector<64x128xf32>
      %16 = arith.maximumf %15, %8 : vector<64x128xf32>
      %c0_12 = arith.constant 0 : index
      %c0_13 = arith.constant 0 : index
      %17 = vector.load %arg5[%c0_12, %c0_13] : memref<64x128xf32, #tpu.memory_space<vmem>>, vector<64x128xf32>
      tpu.vector_store %arg5[%c0_12, %c0_13], %16 {strides = array<i32>} : memref<64x128xf32, #tpu.memory_space<vmem>>, vector<64x128xf32>,
    } else {
    }
    return
  }
  func.func @transform_0(%arg0: i32, %arg1: i32) -> (i32, i32, i32) {
    %c0_i32 = arith.constant 0 : i32
    %c0_i32_0 = arith.constant 0 : i32
    return %arg1, %arg0, %c0_i32 : i32, i32, i32
  }
  func.func @transform_1(%arg0: i32, %arg1: i32) -> (i32, i32) {
    %c0_i32 = arith.constant 0 : i32
    %c0_i32_0 = arith.constant 0 : i32
    %c0_i32_1 = arith.constant 0 : i32
    return %c0_i32, %c0_i32_0 : i32, i32
  }
  func.func @transform_2(%arg0: i32, %arg1: i32) -> (i32, i32) {
    %c0_i32 = arith.constant 0 : i32
    %c0_i32_0 = arith.constant 0 : i32
    %c0_i32_1 = arith.constant 0 : i32
    return %c0_i32, %c0_i32_0 : i32, i32
  }
  func.func @transform_3(%arg0: i32, %arg1: i32) -> (i32, i32) {
    %c0_i32 = arith.constant 0 : i32
    %c0_i32_0 = arith.constant 0 : i32
    return %arg0, %c0_i32 : i32, i32
  }
}

module attributes {stable_mosaic.version = 11 : i64} {
  func.func @_fc_stack_kernel(%arg0: i32, %arg1: memref<16x400xbf16, #tpu.memory_space<vmem>>, %arg2: memref<400x128xbf16, #tpu.memory_space<vmem>>, %arg3: memref<1x128xf32, #tpu.memory_space<vmem>>, %arg4: memref<128x128xbf16, #tpu.memory_space<vmem>>, %arg5: memref<1x128xf32, #tpu.memory_space<vmem>>, %arg6: memref<128x128xbf16, #tpu.memory_space<vmem>>, %arg7: memref<1x128xf32, #tpu.memory_space<vmem>>, %arg8: memref<16x128xf32, #tpu.memory_space<vmem>>) attributes {dimension_semantics = [#tpu.dimension_semantics<parallel>], iteration_bounds = array<i64: 1>, scalar_prefetch = 0 : i64, scratch_operands = 0 : i64, tpu.core_type = #tpu.core_type<tc>, window_params = [{transform_indices = @transform_0, window_bounds = array<i64: 16, 400>}, {pipeline_mode = #tpu.pipeline_mode<synchronous>, transform_indices = @transform_1, window_bounds = array<i64: 400, 128>}, {pipeline_mode = #tpu.pipeline_mode<synchronous>, transform_indices = @transform_2, window_bounds = array<i64: 1, 128>}, {pipeline_mode = #tpu.pipeline_mode<synchronous>, transform_indices = @transform_3, window_bounds = array<i64: 128, 128>}, {pipeline_mode = #tpu.pipeline_mode<synchronous>, transform_indices = @transform_4, window_bounds = array<i64: 1, 128>}, {pipeline_mode = #tpu.pipeline_mode<synchronous>, transform_indices = @transform_5, window_bounds = array<i64: 128, 128>}, {pipeline_mode = #tpu.pipeline_mode<synchronous>, transform_indices = @transform_6, window_bounds = array<i64: 1, 128>}, {transform_indices = @transform_7, window_bounds = array<i64: 16, 128>}]} {
    %c0 = arith.constant 0 : index
    %c0_0 = arith.constant 0 : index
    %0 = vector.load %arg1[%c0, %c0_0] : memref<16x400xbf16, #tpu.memory_space<vmem>>, vector<16x400xbf16>
    %c0_1 = arith.constant 0 : index
    %c0_2 = arith.constant 0 : index
    %1 = vector.load %arg2[%c0_1, %c0_2] : memref<400x128xbf16, #tpu.memory_space<vmem>>, vector<400x128xbf16>
    %cst = arith.constant dense<0.000000e+00> : vector<16x128xf32>
    %2 = tpu.matmul %0, %1, %cst {dimension_numbers = #tpu.dot_dimension_numbers<[1], [0], [0], [1], [0, 0, 1, 1], [], []>} : vector<16x400xbf16>, vector<400x128xbf16>, vector<16x128xf32> -> vector<16x128xf32>
    %c0_3 = arith.constant 0 : index
    %c0_4 = arith.constant 0 : index
    %3 = vector.load %arg3[%c0_3, %c0_4] : memref<1x128xf32, #tpu.memory_space<vmem>>, vector<1x128xf32>
    %4 = vector.broadcast %3 : vector<1x128xf32> to vector<16x128xf32>
    %5 = arith.addf %2, %4 : vector<16x128xf32>
    %cst_5 = arith.constant 0.000000e+00 : f32
    %6 = vector.broadcast %cst_5 : f32 to vector<16x128xf32>
    %7 = arith.maximumf %5, %6 : vector<16x128xf32>
    %8 = arith.truncf %7 : vector<16x128xf32> to vector<16x128xbf16>
    %c0_6 = arith.constant 0 : index
    %c0_7 = arith.constant 0 : index
    %9 = vector.load %arg4[%c0_6, %c0_7] : memref<128x128xbf16, #tpu.memory_space<vmem>>, vector<128x128xbf16>
    %cst_8 = arith.constant dense<0.000000e+00> : vector<16x128xf32>
    %10 = tpu.matmul %8, %9, %cst_8 {dimension_numbers = #tpu.dot_dimension_numbers<[1], [0], [0], [1], [0, 0, 1, 1], [], []>} : vector<16x128xbf16>, vector<128x128xbf16>, vector<16x128xf32> -> vector<16x128xf32>
    %c0_9 = arith.constant 0 : index
    %c0_10 = arith.constant 0 : index
    %11 = vector.load %arg5[%c0_9, %c0_10] : memref<1x128xf32, #tpu.memory_space<vmem>>, vector<1x128xf32>
    %12 = vector.broadcast %11 : vector<1x128xf32> to vector<16x128xf32>
    %13 = arith.addf %10, %12 : vector<16x128xf32>
    %cst_11 = arith.constant 0.000000e+00 : f32
    %14 = vector.broadcast %cst_11 : f32 to vector<16x128xf32>
    %15 = arith.maximumf %13, %14 : vector<16x128xf32>
    %16 = arith.truncf %15 : vector<16x128xf32> to vector<16x128xbf16>
    %c0_12 = arith.constant 0 : index
    %c0_13 = arith.constant 0 : index
    %17 = vector.load %arg6[%c0_12, %c0_13] : memref<128x128xbf16, #tpu.memory_space<vmem>>, vector<128x128xbf16>
    %cst_14 = arith.constant dense<0.000000e+00> : vector<16x128xf32>
    %18 = tpu.matmul %16, %17, %cst_14 {dimension_numbers = #tpu.dot_dimension_numbers<[1], [0], [0], [1], [0, 0, 1, 1], [], []>} : vector<16x128xbf16>, vector<128x128xbf16>, vector<16x128xf32> -> vector<16x128xf32>
    %c0_15 = arith.constant 0 : index
    %c0_16 = arith.constant 0 : index
    %19 = vector.load %arg7[%c0_15, %c0_16] : memref<1x128xf32, #tpu.memory_space<vmem>>, vector<1x128xf32>
    %20 = vector.broadcast %19 : vector<1x128xf32> to vector<16x128xf32>
    %21 = arith.addf %18, %20 : vector<16x128xf32>
    %c0_17 = arith.constant 0 : index
    %c0_18 = arith.constant 0 : index
    %22 = vector.load %arg8[%c0_17, %c0_18] : memref<16x128xf32, #tpu.memory_space<vmem>>, vector<16x128xf32>
    tpu.vector_store %arg8[%c0_17, %c0_18], %21 {strides = array<i32>} : memref<16x128xf32, #tpu.memory_space<vmem>>, vector<16x128xf32>,
    return
  }
  func.func @transform_0(%arg0: i32) -> (i32, i32) {
    %c0_i32 = arith.constant 0 : i32
    %c0_i32_0 = arith.constant 0 : i32
    return %arg0, %c0_i32 : i32, i32
  }
  func.func @transform_1(%arg0: i32) -> (i32, i32) {
    %c0_i32 = arith.constant 0 : i32
    %c0_i32_0 = arith.constant 0 : i32
    %c0_i32_1 = arith.constant 0 : i32
    return %c0_i32, %c0_i32_0 : i32, i32
  }
  func.func @transform_2(%arg0: i32) -> (i32, i32) {
    %c0_i32 = arith.constant 0 : i32
    %c0_i32_0 = arith.constant 0 : i32
    %c0_i32_1 = arith.constant 0 : i32
    return %c0_i32, %c0_i32_0 : i32, i32
  }
  func.func @transform_3(%arg0: i32) -> (i32, i32) {
    %c0_i32 = arith.constant 0 : i32
    %c0_i32_0 = arith.constant 0 : i32
    %c0_i32_1 = arith.constant 0 : i32
    return %c0_i32, %c0_i32_0 : i32, i32
  }
  func.func @transform_4(%arg0: i32) -> (i32, i32) {
    %c0_i32 = arith.constant 0 : i32
    %c0_i32_0 = arith.constant 0 : i32
    %c0_i32_1 = arith.constant 0 : i32
    return %c0_i32, %c0_i32_0 : i32, i32
  }
  func.func @transform_5(%arg0: i32) -> (i32, i32) {
    %c0_i32 = arith.constant 0 : i32
    %c0_i32_0 = arith.constant 0 : i32
    %c0_i32_1 = arith.constant 0 : i32
    return %c0_i32, %c0_i32_0 : i32, i32
  }
  func.func @transform_6(%arg0: i32) -> (i32, i32) {
    %c0_i32 = arith.constant 0 : i32
    %c0_i32_0 = arith.constant 0 : i32
    %c0_i32_1 = arith.constant 0 : i32
    return %c0_i32, %c0_i32_0 : i32, i32
  }
  func.func @transform_7(%arg0: i32) -> (i32, i32) {
    %c0_i32 = arith.constant 0 : i32
    %c0_i32_0 = arith.constant 0 : i32
    return %arg0, %c0_i32 : i32, i32
  }
}

</mosaic_0001>

<llo_original>
// kernel: net_forward.3
$region0: #{net_forward.3}
  #allocation0 [shape = 'u32[]', space=smem, size = 0x4, offset = 0x4, fixed_abs, tag = 'smem constant byte address 0x4 - core index']
  #allocation1 [shape = 'u32[72,128]{1,0:T(1,128)}', space=vmem, size = 0x9000, scoped, tag = 'internal scratch']
  %s0 = inlined_call_operand.vmem [shape: bf16[4,400,25], index: 0, kind: input, shape index: {}]
  %s1 = inlined_call_operand.vmem [shape: bf16[25,128], index: 1, kind: input, shape index: {}]
  %s2 = inlined_call_operand.vmem [shape: f32[1,128], index: 2, kind: input, shape index: {}]
  %s3 = inlined_call_operand.vmem [shape: f32[400,128], index: 3, kind: output, shape index: {}]
  %s4 = sld [smem:[#allocation0]]
  $region53: #{net_forward.3} parent=0
    _
  %s6 = ssub.s32 1, %s4
  %s7 = scalar_select 0, %s6, %s4
  loop: start=0, step=1, limit=6
  $region2: #{net_forward.3} parent=0 // loop_pre_header
    _
  $region3: #{net_forward.3} parent=0 // loop_header
    %s9 = sphi 0, %s13
    %p10 = scmp.ge.s32.totalorder %s9, 6
    %s16 = sphi 0, %s28
    %s17 = sphi 0, %s24
    %s18 = sphi 0, %s16
    %s19 = sphi 0, %s17
    %s20 = sphi 0, %s18
    %s21 = sphi 0, %s19
    %s33 = sphi 0, %s35
    %s36 = sphi 0, %s33
    %s37 = sphi 0, %s36
    %s53 = sphi 0, %s37
    %s57 = sphi 0, %s57
    %s59 = sphi 0, %s57
    %s60 = sphi 0, %s59
    %s74 = sphi 0, %s60
    %s78 = sphi 0, %s78
    %s80 = sphi 0, %s78
    %s81 = sphi 0, %s80
    %s95 = sphi 0, %s81
    %s101 = sphi 0, %s103
    %s104 = sphi 0, %s101
    %s105 = sphi 0, %s104
    %s121 = sphi 0, %s105
  $region4: #{net_forward.3} parent=0 // loop_header_branch
    %12 = sbr.rel (%p10) target = $region8
  $region5: #{net_forward.3} parent=0 // loop_body
    %s14 = ssub.s32 %s9, 1
    %s15 = ssub.s32 %s9, 2
    %s22 = sadd.s32 1, %s17
    %p23 = scmp.ge.s32.totalorder %s22, 4
    %s24 = scalar_select %p23, 0, %s22
    %s25 = sadd.s32 1, %s16
    %s26 = scalar_select %p23, %s25, %s16
    %p27 = scmp.ge.s32.totalorder %s26, 1
    %s28 = scalar_select %p27, 0, %s26
    %s29 = ssub.s32 %s17, %s24
    %s30 = ssub.s32 %s16, %s28
    %s31 = sor.u32 %s29, %s30
    %p32 = scmp.eq.s32.totalorder %s31, 0
    %s34 = sadd.s32 %s33, 1
    %s35 = scalar_select %p32, %s33, %s34
    %p38 = pneg %p32
    %p39 = scmp.eq.s32.totalorder %s9, 3
    %p40 = por %p38, %p39
    %p41 = scmp.ne.s32.totalorder %s33, %s36
    %p42 = scmp.eq.s32.totalorder %s9, 0
    %p43 = por %p41, %p42
    %p44 = scmp.ne.s32.totalorder %s33, %s36
    %p45 = scmp.eq.s32.totalorder %s14, 3
    %p46 = por %p44, %p45
    %p47 = scmp.ne.s32.totalorder %s36, %s37
    %p48 = scmp.eq.s32.totalorder %s14, 0
    %p49 = por %p47, %p48
    %p50 = scmp.ne.s32.totalorder %s36, %s37
    %p51 = scmp.eq.s32.totalorder %s15, 3
    %p52 = por %p50, %p51
    %p54 = scmp.ne.s32.totalorder %s37, %s53
    %p55 = scmp.eq.s32.totalorder %s15, 0
    %p56 = por %p54, %p55
    %s58 = sadd.s32 %s57, 1
    %p61 = scmp.eq.s32.totalorder %s9, 3
    %p62 = scmp.ne.s32.totalorder %s57, %s59
    %p63 = scmp.eq.s32.totalorder %s9, 0
    %p64 = por %p62, %p63
    %p65 = scmp.ne.s32.totalorder %s57, %s59
    %p66 = scmp.eq.s32.totalorder %s14, 3
    %p67 = por %p65, %p66
    %p68 = scmp.ne.s32.totalorder %s59, %s60
    %p69 = scmp.eq.s32.totalorder %s14, 0
    %p70 = por %p68, %p69
    %p71 = scmp.ne.s32.totalorder %s59, %s60
    %p72 = scmp.eq.s32.totalorder %s15, 3
    %p73 = por %p71, %p72
    %p75 = scmp.ne.s32.totalorder %s60, %s74
    %p76 = scmp.eq.s32.totalorder %s15, 0
    %p77 = por %p75, %p76
    %s79 = sadd.s32 %s78, 1
    %p82 = scmp.eq.s32.totalorder %s9, 3
    %p83 = scmp.ne.s32.totalorder %s78, %s80
    %p84 = scmp.eq.s32.totalorder %s9, 0
    %p85 = por %p83, %p84
    %p86 = scmp.ne.s32.totalorder %s78, %s80
    %p87 = scmp.eq.s32.totalorder %s14, 3
    %p88 = por %p86, %p87
    %p89 = scmp.ne.s32.totalorder %s80, %s81
    %p90 = scmp.eq.s32.totalorder %s14, 0
    %p91 = por %p89, %p90
    %p92 = scmp.ne.s32.totalorder %s80, %s81
    %p93 = scmp.eq.s32.totalorder %s15, 3
    %p94 = por %p92, %p93
    %p96 = scmp.ne.s32.totalorder %s81, %s95
    %p97 = scmp.eq.s32.totalorder %s15, 0
    %p98 = por %p96, %p97
    %s99 = ssub.s32 %s16, %s28
    %p100 = scmp.eq.s32.totalorder %s99, 0
    %s102 = sadd.s32 %s101, 1
    %s103 = scalar_select %p100, %s101, %s102
    %p106 = pneg %p100
    %p107 = scmp.eq.s32.totalorder %s9, 3
    %p108 = por %p106, %p107
    %p109 = scmp.ne.s32.totalorder %s101, %s104
    %p110 = scmp.eq.s32.totalorder %s9, 0
    %p111 = por %p109, %p110
    %p112 = scmp.ne.s32.totalorder %s101, %s104
    %p113 = scmp.eq.s32.totalorder %s14, 3
    %p114 = por %p112, %p113
    %p115 = scmp.ne.s32.totalorder %s104, %s105
    %p116 = scmp.eq.s32.totalorder %s14, 0
    %p117 = por %p115, %p116
    %p118 = scmp.ne.s32.totalorder %s104, %s105
    %p119 = scmp.eq.s32.totalorder %s15, 3
    %p120 = por %p118, %p119
    %p122 = scmp.ne.s32.totalorder %s105, %s121
    %p123 = scmp.eq.s32.totalorder %s15, 0
    %p124 = por %p122, %p123
    %p125 = scmp.le.s32.totalorder 1, %s9
    %p126 = scmp.lt.s32.totalorder %s9, 5
    %p127 = pnand %p125, %p126
    %p128 = pneg %p127
    // Predicated region
    $region9: #{net_forward.3} parent=5 // pred_check
      _
    $region10: #{net_forward.3} parent=5 // pred_check_branch
      %130 = sbr.rel (%p127) target = $region12
    $region11: #{net_forward.3} parent=5 // pred_region
      %s131 = ssub.s32 %s9, 1
      // Predicated region
      $region13: #{net_forward.3} parent=11 // pred_check
        %p132 = pneg %p70
      $region14: #{net_forward.3} parent=11 // pred_check_branch
        %134 = sbr.rel (%p132) target = $region16
      $region15: #{net_forward.3} parent=11 // pred_region
        _
      $region16: #{net_forward.3} parent=11 // pred_fallthru
        _
      // Predicated region
      $region17: #{net_forward.3} parent=11 // pred_check
        %p135 = pneg %p91
      $region18: #{net_forward.3} parent=11 // pred_check_branch
        %137 = sbr.rel (%p135) target = $region20
      $region19: #{net_forward.3} parent=11 // pred_region
        _
      $region20: #{net_forward.3} parent=11 // pred_fallthru
        _
    $region12: #{net_forward.3} parent=5 // pred_fallthru
      _
    %p138 = scmp.lt.s32.totalorder %s9, 4
    // Predicated region
    $region21: #{net_forward.3} parent=5 // pred_check
      %p139 = pneg %p138
    $region22: #{net_forward.3} parent=5 // pred_check_branch
      %141 = sbr.rel (%p139) target = $region24
    $region23: #{net_forward.3} parent=5 // pred_region
      // Predicated region
      $region25: #{net_forward.3} parent=23 // pred_check
        %p142 = pneg %p43
      $region26: #{net_forward.3} parent=23 // pred_check_branch
        %144 = sbr.rel (%p142) target = $region28
      $region27: #{net_forward.3} parent=23 // pred_region
        %s145 = smul.u32 50, %s16
        %p146 = scmp.lt.s32.totalorder %s17, 3
        %s147 = scalar_select %p146, %s17, 3
        %p148 = scmp.lt.s32.totalorder %s145, 49
        %s149 = scalar_select %p148, %s145, 49
        %s150 = smul.addr %s147, 50
        %s151 = sadd.s32 %s149, %s150
        %s152 = smul.addr %s151, 4
        %s153 = scalar_lea.vmem %s0, %s152
        %s154 = smul.u32 50, %s16
      $region28: #{net_forward.3} parent=23 // pred_fallthru
        _
    $region24: #{net_forward.3} parent=5 // pred_fallthru
      _
    %p155 = scmp.le.s32.totalorder 1, %s9
    %p156 = scmp.lt.s32.totalorder %s9, 5
    %p157 = pnand %p155, %p156
    %p158 = pneg %p157
    // Predicated region
    $region29: #{net_forward.3} parent=5 // pred_check
      _
    $region30: #{net_forward.3} parent=5 // pred_check_branch
      %160 = sbr.rel (%p157) target = $region32
    $region31: #{net_forward.3} parent=5 // pred_region
      %s161 = ssub.s32 %s9, 1
      %s162 = smul.u32 50, %s18
      %p163 = scmp.lt.s32.totalorder %s19, 3
      %s164 = scalar_select %p163, %s19, 3
      %p165 = scmp.lt.s32.totalorder %s162, 49
      %s166 = scalar_select %p165, %s162, 49
      %s167 = smul.addr %s164, 50
      %s168 = sadd.s32 %s166, %s167
      %s169 = smul.addr %s168, 4
      %s170 = scalar_lea.vmem %s0, %s169
      %p171 = pneg %p49
      %p172 = pneg %p46
      %p173 = pneg %p70
      %p174 = pneg %p67
      %p175 = pneg %p91
      %p176 = pneg %p88
      %p177 = pneg %p117
      %p178 = pneg %p114
      %s179 = smul.u32 50, %s18
      %p180 = scmp.lt.s32.totalorder %s179, 49
      %s181 = scalar_select %p180, %s179, 49
      %s182 = smul.addr %s181, 8
      %s183 = scalar_lea.vmem %s3, %s182
      %s184 = smul.u32 50, %s18
      %p185 = scmp.lt.s32.totalorder %s19, 3
      %s186 = scalar_select %p185, %s19, 3
      %p187 = scmp.lt.s32.totalorder %s184, 49
      %s188 = scalar_select %p187, %s184, 49
      %s189 = smul.addr %s186, 50
      %s190 = sadd.s32 %s188, %s189
      %s191 = smul.addr %s190, 4
      %s192 = scalar_lea.vmem %s0, %s191
      %s193 = smul.u32 50, %s18
      %s194 = smul.u32 50, %s18
      %p195 = scmp.lt.s32.totalorder %s194, 49
      %s196 = scalar_select %p195, %s194, 49
      %s197 = smul.addr %s196, 8
      %s198 = scalar_lea.vmem %s3, %s197
      %s199 = smul.u32 50, %s18
      %v201 = vld [vmem:[%s192] sm:$0xf]
      %v202 = vld [vmem:[%s192 + $0x4] sm:$0xf]
      %v203 = vld [vmem:[%s192 + $0x8] sm:$0xf]
      %v204 = vld [vmem:[%s192 + $0xc] sm:$0xf]
      %v205 = vld [vmem:[%s192 + $0x10] sm:$0xf]
      %v206 = vld [vmem:[%s192 + $0x14] sm:$0xf]
      %v207 = vld [vmem:[%s192 + $0x18] sm:$0xf]
      %v208 = vld [vmem:[%s192 + $0x1c] sm:$0xf]
      %v209 = vld [vmem:[%s192 + $0x20] sm:$0xf]
      %v210 = vld [vmem:[%s192 + $0x24] sm:$0xf]
      %v211 = vld [vmem:[%s192 + $0x28] sm:$0xf]
      %v212 = vld [vmem:[%s192 + $0x2c] sm:$0xf]
      %v213 = vld [vmem:[%s192 + $0x30] sm:$0xf]
      %v214 = vld [vmem:[%s192 + $0x34] sm:$0xf]
      %v215 = vld [vmem:[%s192 + $0x38] sm:$0xf]
      %v216 = vld [vmem:[%s192 + $0x3c] sm:$0xf]
      %v217 = vld [vmem:[%s192 + $0x40] sm:$0xf]
      %v218 = vld [vmem:[%s192 + $0x44] sm:$0xf]
      %v219 = vld [vmem:[%s192 + $0x48] sm:$0xf]
      %v220 = vld [vmem:[%s192 + $0x4c] sm:$0xf]
      %v221 = vld [vmem:[%s192 + $0x50] sm:$0xf]
      %v222 = vld [vmem:[%s192 + $0x54] sm:$0xf]
      %v223 = vld [vmem:[%s192 + $0x58] sm:$0xf]
      %v224 = vld [vmem:[%s192 + $0x5c] sm:$0xf]
      %v225 = vld [vmem:[%s192 + $0x60] sm:$0xf]
      %v226 = vld [vmem:[%s192 + $0x64] sm:$0xf]
      %v227 = vld [vmem:[%s192 + $0x68] sm:$0xf]
      %v228 = vld [vmem:[%s192 + $0x6c] sm:$0xf]
      %v229 = vld [vmem:[%s192 + $0x70] sm:$0xf]
      %v230 = vld [vmem:[%s192 + $0x74] sm:$0xf]
      %v231 = vld [vmem:[%s192 + $0x78] sm:$0xf]
      %v232 = vld [vmem:[%s192 + $0x7c] sm:$0xf]
      %v233 = vld [vmem:[%s192 + $0x80] sm:$0xf]
      %v234 = vld [vmem:[%s192 + $0x84] sm:$0xf]
      %v235 = vld [vmem:[%s192 + $0x88] sm:$0xf]
      %v236 = vld [vmem:[%s192 + $0x8c] sm:$0xf]
      %v237 = vld [vmem:[%s192 + $0x90] sm:$0xf]
      %v238 = vld [vmem:[%s192 + $0x94] sm:$0xf]
      %v239 = vld [vmem:[%s192 + $0x98] sm:$0xf]
      %v240 = vld [vmem:[%s192 + $0x9c] sm:$0xf]
      %v241 = vld [vmem:[%s192 + $0xa0] sm:$0xf]
      %v242 = vld [vmem:[%s192 + $0xa4] sm:$0xf]
      %v243 = vld [vmem:[%s192 + $0xa8] sm:$0xf]
      %v244 = vld [vmem:[%s192 + $0xac] sm:$0xf]
      %v245 = vld [vmem:[%s192 + $0xb0] sm:$0xf]
      %v246 = vld [vmem:[%s192 + $0xb4] sm:$0xf]
      %v247 = vld [vmem:[%s192 + $0xb8] sm:$0xf]
      %v248 = vld [vmem:[%s192 + $0xbc] sm:$0xf]
      %v249 = vld [vmem:[%s192 + $0xc0] sm:$0xf]
      %v250 = vld [vmem:[%s192 + $0xc4] sm:$0xf]
      %v251 = vld [vmem:[%s1] sm:$0xf]
      %v252 = vld [vmem:[%s1 + $0x4] sm:$0xf]
      %v253 = vld [vmem:[%s1 + $0x8] sm:$0xf]
      %v254 = vld [vmem:[%s1 + $0xc] sm:$0x1]
      %v255 = vld [vmem:[%s2] sm:$0x1]
      %v257 = vperm.slane %v255, 0
      %v309 = vunpack.c.l.b16 %v201
      %v310 = vunpack.c.l.b16 %v202
      %v311 = vunpack.c.l.b16 %v203
      %v312 = vunpack.c.l.b16 %v204
      %v313 = vunpack.c.l.b16 %v205
      %v314 = vunpack.c.l.b16 %v206
      %v315 = vunpack.c.l.b16 %v207
      %v316 = vunpack.c.l.b16 %v208
      %v317 = vunpack.c.l.b16 %v209
      %v318 = vunpack.c.l.b16 %v210
      %v319 = vunpack.c.l.b16 %v211
      %v320 = vunpack.c.l.b16 %v212
      %v321 = vunpack.c.l.b16 %v213
      %v322 = vunpack.c.l.b16 %v214
      %v323 = vunpack.c.l.b16 %v215
      %v324 = vunpack.c.l.b16 %v216
      %v325 = vunpack.c.l.b16 %v217
      %v326 = vunpack.c.l.b16 %v218
      %v327 = vunpack.c.l.b16 %v219
      %v328 = vunpack.c.l.b16 %v220
      %v329 = vunpack.c.l.b16 %v221
      %v330 = vunpack.c.l.b16 %v222
      %v331 = vunpack.c.l.b16 %v223
      %v332 = vunpack.c.l.b16 %v224
      %v333 = vunpack.c.l.b16 %v225
      %v334 = vunpack.c.l.b16 %v226
      %v335 = vunpack.c.l.b16 %v227
      %v336 = vunpack.c.l.b16 %v228
      %v337 = vunpack.c.l.b16 %v229
      %v338 = vunpack.c.l.b16 %v230
      %v339 = vunpack.c.l.b16 %v231
      %v340 = vunpack.c.l.b16 %v232
      %v341 = vunpack.c.l.b16 %v233
      %v342 = vunpack.c.l.b16 %v234
      %v343 = vunpack.c.l.b16 %v235
      %v344 = vunpack.c.l.b16 %v236
      %v345 = vunpack.c.l.b16 %v237
      %v346 = vunpack.c.l.b16 %v238
      %v347 = vunpack.c.l.b16 %v239
      %v348 = vunpack.c.l.b16 %v240
      %v349 = vunpack.c.l.b16 %v241
      %v350 = vunpack.c.l.b16 %v242
      %v351 = vunpack.c.l.b16 %v243
      %v352 = vunpack.c.l.b16 %v244
      %v353 = vunpack.c.l.b16 %v245
      %v354 = vunpack.c.l.b16 %v246
      %v355 = vunpack.c.l.b16 %v247
      %v356 = vunpack.c.l.b16 %v248
      %v357 = vunpack.c.l.b16 %v249
      %v358 = vunpack.c.l.b16 %v250
      %v359 = vpack.c.b16 %v310, %v309
      %v360 = vpack.c.b16 %v312, %v311
      %v361 = vpack.c.b16 %v314, %v313
      %v362 = vpack.c.b16 %v316, %v315
      %v363 = vpack.c.b16 %v318, %v317
      %v364 = vpack.c.b16 %v320, %v319
      %v365 = vpack.c.b16 %v322, %v321
      %v366 = vpack.c.b16 %v324, %v323
      %v367 = vpack.c.b16 %v326, %v325
      %v368 = vpack.c.b16 %v328, %v327
      %v369 = vpack.c.b16 %v330, %v329
      %v370 = vpack.c.b16 %v332, %v331
      %v371 = vpack.c.b16 %v334, %v333
      %v372 = vpack.c.b16 %v336, %v335
      %v373 = vpack.c.b16 %v338, %v337
      %v374 = vpack.c.b16 %v340, %v339
      %v375 = vpack.c.b16 %v342, %v341
      %v376 = vpack.c.b16 %v344, %v343
      %v377 = vpack.c.b16 %v346, %v345
      %v378 = vpack.c.b16 %v348, %v347
      %v379 = vpack.c.b16 %v350, %v349
      %v380 = vpack.c.b16 %v352, %v351
      %v381 = vpack.c.b16 %v354, %v353
      %v382 = vpack.c.b16 %v356, %v355
      %v383 = vpack.c.b16 %v358, %v357
      %v388 = vunpack.c.l.b16 %v251
      %v389 = vunpack.c.l.b16 %v252
      %v390 = vunpack.c.l.b16 %v253
      %v391 = vunpack.c.l.b16 %v254
      %v392 = vpack.c.b16 %v389, %v388
      %v393 = vpack.c.b16 %v391, %v390
      %vm395 = vcmask 203776
      %v397 = vsel %vm395, %v359, 0
      %v400 = vsel %vm395, %v360, 0
      %v403 = vsel %vm395, %v361, 0
      %v406 = vsel %vm395, %v362, 0
      %v409 = vsel %vm395, %v363, 0
      %v412 = vsel %vm395, %v364, 0
      %v415 = vsel %vm395, %v365, 0
      %v418 = vsel %vm395, %v366, 0
      %v421 = vsel %vm395, %v367, 0
      %v424 = vsel %vm395, %v368, 0
      %v427 = vsel %vm395, %v369, 0
      %v430 = vsel %vm395, %v370, 0
      %v433 = vsel %vm395, %v371, 0
      %v436 = vsel %vm395, %v372, 0
      %v439 = vsel %vm395, %v373, 0
      %v442 = vsel %vm395, %v374, 0
      %v445 = vsel %vm395, %v375, 0
      %v448 = vsel %vm395, %v376, 0
      %v451 = vsel %vm395, %v377, 0
      %v454 = vsel %vm395, %v378, 0
      %v457 = vsel %vm395, %v379, 0
      %v460 = vsel %vm395, %v380, 0
      %v463 = vsel %vm395, %v381, 0
      %v466 = vsel %vm395, %v382, 0
      %v469 = vsel %vm395, %v383, 0
      %vm471 = vcmask 1043456
      %vm472 = vcmask 1044480
      %v473 = vsel %vm471, 4294967295, 65535
      %v474 = vsel %vm472, %v473, 0
      %v476 = vand.u32 %v393, %v474
      %478 = vmatpush.bf16.msra.mxu0 0
      %479 = vmatpush.bf16.msra.mxu0 0
      %480 = vmatpush.bf16.msra.mxu0 0
      %481 = vmatpush.bf16.msra.mxu0 0
      %482 = vmatpush.bf16.msra.mxu0 0
      %483 = vmatpush.bf16.msra.mxu0 0
      %484 = vmatpush.bf16.msra.mxu0 %v476
      %485 = vmatpush.bf16.msra.mxu0 %v392
      %486 = vmatmul.bf16.gmra.mxu0 %v397
      %v487 = vpop.f32.mrf.mxu0
      %v488 = vadd.f32 %v257, %v487
      %v489 = vpop.f32.mrf.mxu0
      %v490 = vadd.f32 %v257, %v489
      %491 = vmatmul.bf16.gmra.mxu0 %v400
      %v492 = vpop.f32.mrf.mxu0
      %v493 = vadd.f32 %v257, %v492
      %v494 = vpop.f32.mrf.mxu0
      %v495 = vadd.f32 %v257, %v494
      %496 = vmatmul.bf16.gmra.mxu0 %v403
      %v497 = vpop.f32.mrf.mxu0
      %v498 = vadd.f32 %v257, %v497
      %v499 = vpop.f32.mrf.mxu0
      %v500 = vadd.f32 %v257, %v499
      %501 = vmatmul.bf16.gmra.mxu0 %v406
      %v502 = vpop.f32.mrf.mxu0
      %v503 = vadd.f32 %v257, %v502
      %v504 = vpop.f32.mrf.mxu0
      %v505 = vadd.f32 %v257, %v504
      %506 = vmatmul.bf16.gmra.mxu0 %v409
      %v507 = vpop.f32.mrf.mxu0
      %v508 = vadd.f32 %v257, %v507
      %v509 = vpop.f32.mrf.mxu0
      %v510 = vadd.f32 %v257, %v509
      %511 = vmatmul.bf16.gmra.mxu0 %v412
      %v512 = vpop.f32.mrf.mxu0
      %v513 = vadd.f32 %v257, %v512
      %v514 = vpop.f32.mrf.mxu0
      %v515 = vadd.f32 %v257, %v514
      %516 = vmatmul.bf16.gmra.mxu0 %v415
      %v517 = vpop.f32.mrf.mxu0
      %v518 = vadd.f32 %v257, %v517
      %v519 = vpop.f32.mrf.mxu0
      %v520 = vadd.f32 %v257, %v519
      %521 = vmatmul.bf16.gmra.mxu0 %v418
      %v522 = vpop.f32.mrf.mxu0
      %v523 = vadd.f32 %v257, %v522
      %v524 = vpop.f32.mrf.mxu0
      %v525 = vadd.f32 %v257, %v524
      %526 = vmatmul.bf16.gmra.mxu0 %v421
      %v527 = vpop.f32.mrf.mxu0
      %v528 = vadd.f32 %v257, %v527
      %v529 = vpop.f32.mrf.mxu0
      %v530 = vadd.f32 %v257, %v529
      %531 = vmatmul.bf16.gmra.mxu0 %v424
      %v532 = vpop.f32.mrf.mxu0
      %v533 = vadd.f32 %v257, %v532
      %v534 = vpop.f32.mrf.mxu0
      %v535 = vadd.f32 %v257, %v534
      %536 = vmatmul.bf16.gmra.mxu0 %v427
      %v537 = vpop.f32.mrf.mxu0
      %v538 = vadd.f32 %v257, %v537
      %v539 = vpop.f32.mrf.mxu0
      %v540 = vadd.f32 %v257, %v539
      %541 = vmatmul.bf16.gmra.mxu0 %v430
      %v542 = vpop.f32.mrf.mxu0
      %v543 = vadd.f32 %v257, %v542
      %v544 = vpop.f32.mrf.mxu0
      %v545 = vadd.f32 %v257, %v544
      %546 = vmatmul.bf16.gmra.mxu0 %v433
      %v547 = vpop.f32.mrf.mxu0
      %v548 = vadd.f32 %v257, %v547
      %v549 = vpop.f32.mrf.mxu0
      %v550 = vadd.f32 %v257, %v549
      %551 = vmatmul.bf16.gmra.mxu0 %v436
      %v552 = vpop.f32.mrf.mxu0
      %v553 = vadd.f32 %v257, %v552
      %v554 = vpop.f32.mrf.mxu0
      %v555 = vadd.f32 %v257, %v554
      %556 = vmatmul.bf16.gmra.mxu0 %v439
      %v557 = vpop.f32.mrf.mxu0
      %v558 = vadd.f32 %v257, %v557
      %v559 = vpop.f32.mrf.mxu0
      %v560 = vadd.f32 %v257, %v559
      %561 = vmatmul.bf16.gmra.mxu0 %v442
      %v562 = vpop.f32.mrf.mxu0
      %v563 = vadd.f32 %v257, %v562
      %v564 = vpop.f32.mrf.mxu0
      %v565 = vadd.f32 %v257, %v564
      %566 = vmatmul.bf16.gmra.mxu0 %v445
      %v567 = vpop.f32.mrf.mxu0
      %v568 = vadd.f32 %v257, %v567
      %v569 = vpop.f32.mrf.mxu0
      %v570 = vadd.f32 %v257, %v569
      %571 = vmatmul.bf16.gmra.mxu0 %v448
      %v572 = vpop.f32.mrf.mxu0
      %v573 = vadd.f32 %v257, %v572
      %v574 = vpop.f32.mrf.mxu0
      %v575 = vadd.f32 %v257, %v574
      %576 = vmatmul.bf16.gmra.mxu0 %v451
      %v577 = vpop.f32.mrf.mxu0
      %v578 = vadd.f32 %v257, %v577
      %v579 = vpop.f32.mrf.mxu0
      %v580 = vadd.f32 %v257, %v579
      %581 = vmatmul.bf16.gmra.mxu0 %v454
      %v582 = vpop.f32.mrf.mxu0
      %v583 = vadd.f32 %v257, %v582
      %v584 = vpop.f32.mrf.mxu0
      %v585 = vadd.f32 %v257, %v584
      %586 = vmatmul.bf16.gmra.mxu0 %v457
      %v587 = vpop.f32.mrf.mxu0
      %v588 = vadd.f32 %v257, %v587
      %v589 = vpop.f32.mrf.mxu0
      %v590 = vadd.f32 %v257, %v589
      %591 = vmatmul.bf16.gmra.mxu0 %v460
      %v592 = vpop.f32.mrf.mxu0
      %v593 = vadd.f32 %v257, %v592
      %v594 = vpop.f32.mrf.mxu0
      %v595 = vadd.f32 %v257, %v594
      %596 = vmatmul.bf16.gmra.mxu0 %v463
      %v597 = vpop.f32.mrf.mxu0
      %v598 = vadd.f32 %v257, %v597
      %v599 = vpop.f32.mrf.mxu0
      %v600 = vadd.f32 %v257, %v599
      %601 = vmatmul.bf16.gmra.mxu0 %v466
      %v602 = vpop.f32.mrf.mxu0
      %v603 = vadd.f32 %v257, %v602
      %v604 = vpop.f32.mrf.mxu0
      %v605 = vadd.f32 %v257, %v604
      %606 = vmatmul.bf16.gmra.mxu0 %v469
      %v607 = vpop.f32.mrf.mxu0
      %v608 = vadd.f32 %v257, %v607
      %v609 = vpop.f32.mrf.mxu0
      %v610 = vadd.f32 %v257, %v609
      %611 = vdwg.mxu0
      %v612 = vmax.f32 %v488, 0.0
      %v613 = vmax.f32 %v490, 0.0
      %v614 = vmax.f32 %v493, 0.0
      %v615 = vmax.f32 %v495, 0.0
      %v616 = vmax.f32 %v498, 0.0
      %v617 = vmax.f32 %v500, 0.0
      %v618 = vmax.f32 %v503, 0.0
      %v619 = vmax.f32 %v505, 0.0
      %v620 = vmax.f32 %v508, 0.0
      %v621 = vmax.f32 %v510, 0.0
      %v622 = vmax.f32 %v513, 0.0
      %v623 = vmax.f32 %v515, 0.0
      %v624 = vmax.f32 %v518, 0.0
      %v625 = vmax.f32 %v520, 0.0
      %v626 = vmax.f32 %v523, 0.0
      %v627 = vmax.f32 %v525, 0.0
      %v628 = vmax.f32 %v528, 0.0
      %v629 = vmax.f32 %v530, 0.0
      %v630 = vmax.f32 %v533, 0.0
      %v631 = vmax.f32 %v535, 0.0
      %v632 = vmax.f32 %v538, 0.0
      %v633 = vmax.f32 %v540, 0.0
      %v634 = vmax.f32 %v543, 0.0
      %v635 = vmax.f32 %v545, 0.0
      %v636 = vmax.f32 %v548, 0.0
      %v637 = vmax.f32 %v550, 0.0
      %v638 = vmax.f32 %v553, 0.0
      %v639 = vmax.f32 %v555, 0.0
      %v640 = vmax.f32 %v558, 0.0
      %v641 = vmax.f32 %v560, 0.0
      %v642 = vmax.f32 %v563, 0.0
      %v643 = vmax.f32 %v565, 0.0
      %v644 = vmax.f32 %v568, 0.0
      %v645 = vmax.f32 %v570, 0.0
      %v646 = vmax.f32 %v573, 0.0
      %v647 = vmax.f32 %v575, 0.0
      %v648 = vmax.f32 %v578, 0.0
      %v649 = vmax.f32 %v580, 0.0
      %v650 = vmax.f32 %v583, 0.0
      %v651 = vmax.f32 %v585, 0.0
      %v652 = vmax.f32 %v588, 0.0
      %v653 = vmax.f32 %v590, 0.0
      %v654 = vmax.f32 %v593, 0.0
      %v655 = vmax.f32 %v595, 0.0
      %v656 = vmax.f32 %v598, 0.0
      %v657 = vmax.f32 %v600, 0.0
      %v658 = vmax.f32 %v603, 0.0
      %v659 = vmax.f32 %v605, 0.0
      %v660 = vmax.f32 %v608, 0.0
      %v661 = vmax.f32 %v610, 0.0
      %p662 = scmp.eq.s32.totalorder %s19, 0
      // Predicated region
      $region33: #{net_forward.3} parent=31 // pred_check
        %p663 = pneg %p662
      $region34: #{net_forward.3} parent=31 // pred_check_branch
        %665 = sbr.rel (%p663) target = $region36
      $region35: #{net_forward.3} parent=31 // pred_region
        %666 = vst [vmem:[%s198] sm:$0xff] %v612
        %667 = vst [vmem:[%s198 + $0x8] sm:$0xff] %v613
        %668 = vst [vmem:[%s198 + $0x10] sm:$0xff] %v614
        %669 = vst [vmem:[%s198 + $0x18] sm:$0xff] %v615
        %670 = vst [vmem:[%s198 + $0x20] sm:$0xff] %v616
        %671 = vst [vmem:[%s198 + $0x28] sm:$0xff] %v617
        %672 = vst [vmem:[%s198 + $0x30] sm:$0xff] %v618
        %673 = vst [vmem:[%s198 + $0x38] sm:$0xff] %v619
        %674 = vst [vmem:[%s198 + $0x40] sm:$0xff] %v620
        %675 = vst [vmem:[%s198 + $0x48] sm:$0xff] %v621
        %676 = vst [vmem:[%s198 + $0x50] sm:$0xff] %v622
        %677 = vst [vmem:[%s198 + $0x58] sm:$0xff] %v623
        %678 = vst [vmem:[%s198 + $0x60] sm:$0xff] %v624
        %679 = vst [vmem:[%s198 + $0x68] sm:$0xff] %v625
        %680 = vst [vmem:[%s198 + $0x70] sm:$0xff] %v626
        %681 = vst [vmem:[%s198 + $0x78] sm:$0xff] %v627
        %682 = vst [vmem:[%s198 + $0x80] sm:$0xff] %v628
        %683 = vst [vmem:[%s198 + $0x88] sm:$0xff] %v629
        %684 = vst [vmem:[%s198 + $0x90] sm:$0xff] %v630
        %685 = vst [vmem:[%s198 + $0x98] sm:$0xff] %v631
        %686 = vst [vmem:[%s198 + $0xa0] sm:$0xff] %v632
        %687 = vst [vmem:[%s198 + $0xa8] sm:$0xff] %v633
        %688 = vst [vmem:[%s198 + $0xb0] sm:$0xff] %v634
        %689 = vst [vmem:[%s198 + $0xb8] sm:$0xff] %v635
        %690 = vst [vmem:[%s198 + $0xc0] sm:$0xff] %v636
        %691 = vst [vmem:[%s198 + $0xc8] sm:$0xff] %v637
        %692 = vst [vmem:[%s198 + $0xd0] sm:$0xff] %v638
        %693 = vst [vmem:[%s198 + $0xd8] sm:$0xff] %v639
        %694 = vst [vmem:[%s198 + $0xe0] sm:$0xff] %v640
        %695 = vst [vmem:[%s198 + $0xe8] sm:$0xff] %v641
        %696 = vst [vmem:[%s198 + $0xf0] sm:$0xff] %v642
        %697 = vst [vmem:[%s198 + $0xf8] sm:$0xff] %v643
        %698 = vst [vmem:[%s198 + $0x100] sm:$0xff] %v644
        %699 = vst [vmem:[%s198 + $0x108] sm:$0xff] %v645
        %700 = vst [vmem:[%s198 + $0x110] sm:$0xff] %v646
        %701 = vst [vmem:[%s198 + $0x118] sm:$0xff] %v647
        %702 = vst [vmem:[%s198 + $0x120] sm:$0xff] %v648
        %703 = vst [vmem:[%s198 + $0x128] sm:$0xff] %v649
        %704 = vst [vmem:[%s198 + $0x130] sm:$0xff] %v650
        %705 = vst [vmem:[%s198 + $0x138] sm:$0xff] %v651
        %706 = vst [vmem:[%s198 + $0x140] sm:$0xff] %v652
        %707 = vst [vmem:[%s198 + $0x148] sm:$0xff] %v653
        %708 = vst [vmem:[%s198 + $0x150] sm:$0xff] %v654
        %709 = vst [vmem:[%s198 + $0x158] sm:$0xff] %v655
        %710 = vst [vmem:[%s198 + $0x160] sm:$0xff] %v656
        %711 = vst [vmem:[%s198 + $0x168] sm:$0xff] %v657
        %712 = vst [vmem:[%s198 + $0x170] sm:$0xff] %v658
        %713 = vst [vmem:[%s198 + $0x178] sm:$0xff] %v659
        %714 = vst [vmem:[%s198 + $0x180] sm:$0xff] %v660
        %715 = vst [vmem:[%s198 + $0x188] sm:$0xff] %v661
      $region36: #{net_forward.3} parent=31 // pred_fallthru
        _
      %p716 = scmp.ne.s32.totalorder %s19, 0
      // Predicated region
      $region37: #{net_forward.3} parent=31 // pred_check
        %p717 = pneg %p716
      $region38: #{net_forward.3} parent=31 // pred_check_branch
        %719 = sbr.rel (%p717) target = $region40
      $region39: #{net_forward.3} parent=31 // pred_region
        %v720 = vld [vmem:[%s198] sm:$0xff]
        %v721 = vld [vmem:[%s198 + $0x8] sm:$0xff]
        %v722 = vld [vmem:[%s198 + $0x10] sm:$0xff]
        %v723 = vld [vmem:[%s198 + $0x18] sm:$0xff]
        %v724 = vld [vmem:[%s198 + $0x20] sm:$0xff]
        %v725 = vld [vmem:[%s198 + $0x28] sm:$0xff]
        %v726 = vld [vmem:[%s198 + $0x30] sm:$0xff]
        %v727 = vld [vmem:[%s198 + $0x38] sm:$0xff]
        %v728 = vld [vmem:[%s198 + $0x40] sm:$0xff]
        %v729 = vld [vmem:[%s198 + $0x48] sm:$0xff]
        %v730 = vld [vmem:[%s198 + $0x50] sm:$0xff]
        %v731 = vld [vmem:[%s198 + $0x58] sm:$0xff]
        %v732 = vld [vmem:[%s198 + $0x60] sm:$0xff]
        %v733 = vld [vmem:[%s198 + $0x68] sm:$0xff]
        %v734 = vld [vmem:[%s198 + $0x70] sm:$0xff]
        %v735 = vld [vmem:[%s198 + $0x78] sm:$0xff]
        %v736 = vld [vmem:[%s198 + $0x80] sm:$0xff]
        %v737 = vld [vmem:[%s198 + $0x88] sm:$0xff]
        %v738 = vld [vmem:[%s198 + $0x90] sm:$0xff]
        %v739 = vld [vmem:[%s198 + $0x98] sm:$0xff]
        %v740 = vld [vmem:[%s198 + $0xa0] sm:$0xff]
        %v741 = vld [vmem:[%s198 + $0xa8] sm:$0xff]
        %v742 = vld [vmem:[%s198 + $0xb0] sm:$0xff]
        %v743 = vld [vmem:[%s198 + $0xb8] sm:$0xff]
        %v744 = vld [vmem:[%s198 + $0xc0] sm:$0xff]
        %v745 = vld [vmem:[%s198 + $0xc8] sm:$0xff]
        %v746 = vld [vmem:[%s198 + $0xd0] sm:$0xff]
        %v747 = vld [vmem:[%s198 + $0xd8] sm:$0xff]
        %v748 = vld [vmem:[%s198 + $0xe0] sm:$0xff]
        %v749 = vld [vmem:[%s198 + $0xe8] sm:$0xff]
        %v750 = vld [vmem:[%s198 + $0xf0] sm:$0xff]
        %v751 = vld [vmem:[%s198 + $0xf8] sm:$0xff]
        %v752 = vld [vmem:[%s198 + $0x100] sm:$0xff]
        %v753 = vld [vmem:[%s198 + $0x108] sm:$0xff]
        %v754 = vld [vmem:[%s198 + $0x110] sm:$0xff]
        %v755 = vld [vmem:[%s198 + $0x118] sm:$0xff]
        %v756 = vld [vmem:[%s198 + $0x120] sm:$0xff]
        %v757 = vld [vmem:[%s198 + $0x128] sm:$0xff]
        %v758 = vld [vmem:[%s198 + $0x130] sm:$0xff]
        %v759 = vld [vmem:[%s198 + $0x138] sm:$0xff]
        %v760 = vld [vmem:[%s198 + $0x140] sm:$0xff]
        %v761 = vld [vmem:[%s198 + $0x148] sm:$0xff]
        %v762 = vld [vmem:[%s198 + $0x150] sm:$0xff]
        %v763 = vld [vmem:[%s198 + $0x158] sm:$0xff]
        %v764 = vld [vmem:[%s198 + $0x160] sm:$0xff]
        %v765 = vld [vmem:[%s198 + $0x168] sm:$0xff]
        %v766 = vld [vmem:[%s198 + $0x170] sm:$0xff]
        %v767 = vld [vmem:[%s198 + $0x178] sm:$0xff]
        %v768 = vld [vmem:[%s198 + $0x180] sm:$0xff]
        %v769 = vld [vmem:[%s198 + $0x188] sm:$0xff]
        %v770 = vmax.f32 %v720, %v612
        %v771 = vmax.f32 %v721, %v613
        %v772 = vmax.f32 %v722, %v614
        %v773 = vmax.f32 %v723, %v615
        %v774 = vmax.f32 %v724, %v616
        %v775 = vmax.f32 %v725, %v617
        %v776 = vmax.f32 %v726, %v618
        %v777 = vmax.f32 %v727, %v619
        %v778 = vmax.f32 %v728, %v620
        %v779 = vmax.f32 %v729, %v621
        %v780 = vmax.f32 %v730, %v622
        %v781 = vmax.f32 %v731, %v623
        %v782 = vmax.f32 %v732, %v624
        %v783 = vmax.f32 %v733, %v625
        %v784 = vmax.f32 %v734, %v626
        %v785 = vmax.f32 %v735, %v627
        %v786 = vmax.f32 %v736, %v628
        %v787 = vmax.f32 %v737, %v629
        %v788 = vmax.f32 %v738, %v630
        %v789 = vmax.f32 %v739, %v631
        %v790 = vmax.f32 %v740, %v632
        %v791 = vmax.f32 %v741, %v633
        %v792 = vmax.f32 %v742, %v634
        %v793 = vmax.f32 %v743, %v635
        %v794 = vmax.f32 %v744, %v636
        %v795 = vmax.f32 %v745, %v637
        %v796 = vmax.f32 %v746, %v638
        %v797 = vmax.f32 %v747, %v639
        %v798 = vmax.f32 %v748, %v640
        %v799 = vmax.f32 %v749, %v641
        %v800 = vmax.f32 %v750, %v642
        %v801 = vmax.f32 %v751, %v643
        %v802 = vmax.f32 %v752, %v644
        %v803 = vmax.f32 %v753, %v645
        %v804 = vmax.f32 %v754, %v646
        %v805 = vmax.f32 %v755, %v647
        %v806 = vmax.f32 %v756, %v648
        %v807 = vmax.f32 %v757, %v649
        %v808 = vmax.f32 %v758, %v650
        %v809 = vmax.f32 %v759, %v651
        %v810 = vmax.f32 %v760, %v652
        %v811 = vmax.f32 %v761, %v653
        %v812 = vmax.f32 %v762, %v654
        %v813 = vmax.f32 %v763, %v655
        %v814 = vmax.f32 %v764, %v656
        %v815 = vmax.f32 %v765, %v657
        %v816 = vmax.f32 %v766, %v658
        %v817 = vmax.f32 %v767, %v659
        %v818 = vmax.f32 %v768, %v660
        %v819 = vmax.f32 %v769, %v661
        %820 = vst [vmem:[%s198] sm:$0xff] %v770
        %821 = vst [vmem:[%s198 + $0x8] sm:$0xff] %v771
        %822 = vst [vmem:[%s198 + $0x10] sm:$0xff] %v772
        %823 = vst [vmem:[%s198 + $0x18] sm:$0xff] %v773
        %824 = vst [vmem:[%s198 + $0x20] sm:$0xff] %v774
        %825 = vst [vmem:[%s198 + $0x28] sm:$0xff] %v775
        %826 = vst [vmem:[%s198 + $0x30] sm:$0xff] %v776
        %827 = vst [vmem:[%s198 + $0x38] sm:$0xff] %v777
        %828 = vst [vmem:[%s198 + $0x40] sm:$0xff] %v778
        %829 = vst [vmem:[%s198 + $0x48] sm:$0xff] %v779
        %830 = vst [vmem:[%s198 + $0x50] sm:$0xff] %v780
        %831 = vst [vmem:[%s198 + $0x58] sm:$0xff] %v781
        %832 = vst [vmem:[%s198 + $0x60] sm:$0xff] %v782
        %833 = vst [vmem:[%s198 + $0x68] sm:$0xff] %v783
        %834 = vst [vmem:[%s198 + $0x70] sm:$0xff] %v784
        %835 = vst [vmem:[%s198 + $0x78] sm:$0xff] %v785
        %836 = vst [vmem:[%s198 + $0x80] sm:$0xff] %v786
        %837 = vst [vmem:[%s198 + $0x88] sm:$0xff] %v787
        %838 = vst [vmem:[%s198 + $0x90] sm:$0xff] %v788
        %839 = vst [vmem:[%s198 + $0x98] sm:$0xff] %v789
        %840 = vst [vmem:[%s198 + $0xa0] sm:$0xff] %v790
        %841 = vst [vmem:[%s198 + $0xa8] sm:$0xff] %v791
        %842 = vst [vmem:[%s198 + $0xb0] sm:$0xff] %v792
        %843 = vst [vmem:[%s198 + $0xb8] sm:$0xff] %v793
        %844 = vst [vmem:[%s198 + $0xc0] sm:$0xff] %v794
        %845 = vst [vmem:[%s198 + $0xc8] sm:$0xff] %v795
        %846 = vst [vmem:[%s198 + $0xd0] sm:$0xff] %v796
        %847 = vst [vmem:[%s198 + $0xd8] sm:$0xff] %v797
        %848 = vst [vmem:[%s198 + $0xe0] sm:$0xff] %v798
        %849 = vst [vmem:[%s198 + $0xe8] sm:$0xff] %v799
        %850 = vst [vmem:[%s198 + $0xf0] sm:$0xff] %v800
        %851 = vst [vmem:[%s198 + $0xf8] sm:$0xff] %v801
        %852 = vst [vmem:[%s198 + $0x100] sm:$0xff] %v802
        %853 = vst [vmem:[%s198 + $0x108] sm:$0xff] %v803
        %854 = vst [vmem:[%s198 + $0x110] sm:$0xff] %v804
        %855 = vst [vmem:[%s198 + $0x118] sm:$0xff] %v805
        %856 = vst [vmem:[%s198 + $0x120] sm:$0xff] %v806
        %857 = vst [vmem:[%s198 + $0x128] sm:$0xff] %v807
        %858 = vst [vmem:[%s198 + $0x130] sm:$0xff] %v808
        %859 = vst [vmem:[%s198 + $0x138] sm:$0xff] %v809
        %860 = vst [vmem:[%s198 + $0x140] sm:$0xff] %v810
        %861 = vst [vmem:[%s198 + $0x148] sm:$0xff] %v811
        %862 = vst [vmem:[%s198 + $0x150] sm:$0xff] %v812
        %863 = vst [vmem:[%s198 + $0x158] sm:$0xff] %v813
        %864 = vst [vmem:[%s198 + $0x160] sm:$0xff] %v814
        %865 = vst [vmem:[%s198 + $0x168] sm:$0xff] %v815
        %866 = vst [vmem:[%s198 + $0x170] sm:$0xff] %v816
        %867 = vst [vmem:[%s198 + $0x178] sm:$0xff] %v817
        %868 = vst [vmem:[%s198 + $0x180] sm:$0xff] %v818
        %869 = vst [vmem:[%s198 + $0x188] sm:$0xff] %v819
      $region40: #{net_forward.3} parent=31 // pred_fallthru
        _
      %s870 = smul.u32 50, %s18
      %p871 = scmp.lt.s32.totalorder %s870, 49
      %s872 = scalar_select %p871, %s870, 49
      %s873 = smul.addr %s872, 8
      %s874 = scalar_lea.vmem %s3, %s873
      // Predicated region
      $region41: #{net_forward.3} parent=31 // pred_check
        %p875 = pneg %p114
      $region42: #{net_forward.3} parent=31 // pred_check_branch
        %877 = sbr.rel (%p875) target = $region44
      $region43: #{net_forward.3} parent=31 // pred_region
        %s878 = smul.u32 50, %s18
      $region44: #{net_forward.3} parent=31 // pred_fallthru
        _
      // Predicated region
      $region45: #{net_forward.3} parent=31 // pred_check
        %p879 = pneg %p114
      $region46: #{net_forward.3} parent=31 // pred_check_branch
        %881 = sbr.rel (%p879) target = $region48
      $region47: #{net_forward.3} parent=31 // pred_region
        %s882 = smul.u32 50, %s18
        %p883 = scmp.lt.s32.totalorder %s882, 49
        %s884 = scalar_select %p883, %s882, 49
        %s885 = smul.addr %s884, 8
        %s886 = scalar_lea.vmem %s3, %s885
      $region48: #{net_forward.3} parent=31 // pred_fallthru
        _
    $region32: #{net_forward.3} parent=5 // pred_fallthru
      _
    %p887 = scmp.le.s32.totalorder 2, %s9
    // Predicated region
    $region49: #{net_forward.3} parent=5 // pred_check
      %p888 = pneg %p887
    $region50: #{net_forward.3} parent=5 // pred_check_branch
      %890 = sbr.rel (%p888) target = $region52
    $region51: #{net_forward.3} parent=5 // pred_region
      %s891 = ssub.s32 %s9, 2
    $region52: #{net_forward.3} parent=5 // pred_fallthru
      _
  $region6: #{net_forward.3} parent=0 // loop_footer
    %s13 = sadd.s32 1, %s9
  $region7: #{net_forward.3} parent=0 // loop_footer_branch
    %8 = sbr.rel target = $region3
  $region8: #{net_forward.3} parent=0 // loop_exit
    _

// kernel: net_forward.4
$region0: #{net_forward.4}
  #allocation0 [shape = 'u32[]', space=smem, size = 0x4, offset = 0x4, fixed_abs, tag = 'smem constant byte address 0x4 - core index']
  #allocation1 [shape = 'u32[72,128]{1,0:T(1,128)}', space=vmem, size = 0x9000, scoped, tag = 'internal scratch']
  %s0 = inlined_call_operand.vmem [shape: bf16[4,64,150], index: 0, kind: input, shape index: {}]
  %s1 = inlined_call_operand.vmem [shape: bf16[150,128], index: 1, kind: input, shape index: {}]
  %s2 = inlined_call_operand.vmem [shape: f32[1,128], index: 2, kind: input, shape index: {}]
  %s3 = inlined_call_operand.vmem [shape: f32[64,128], index: 3, kind: output, shape index: {}]
  %s4 = sld [smem:[#allocation0]]
  $region53: #{net_forward.4} parent=0
    _
  %s6 = ssub.s32 1, %s4
  %s7 = scalar_select 0, %s6, %s4
  loop: start=0, step=1, limit=6
  $region2: #{net_forward.4} parent=0 // loop_pre_header
    _
  $region3: #{net_forward.4} parent=0 // loop_header
    %s9 = sphi 0, %s13
    %p10 = scmp.ge.s32.totalorder %s9, 6
    %s16 = sphi 0, %s28
    %s17 = sphi 0, %s24
    %s18 = sphi 0, %s16
    %s19 = sphi 0, %s17
    %s20 = sphi 0, %s18
    %s21 = sphi 0, %s19
    %s33 = sphi 0, %s35
    %s36 = sphi 0, %s33
    %s37 = sphi 0, %s36
    %s53 = sphi 0, %s37
    %s57 = sphi 0, %s57
    %s59 = sphi 0, %s57
    %s60 = sphi 0, %s59
    %s74 = sphi 0, %s60
    %s78 = sphi 0, %s78
    %s80 = sphi 0, %s78
    %s81 = sphi 0, %s80
    %s95 = sphi 0, %s81
    %s101 = sphi 0, %s103
    %s104 = sphi 0, %s101
    %s105 = sphi 0, %s104
    %s121 = sphi 0, %s105
  $region4: #{net_forward.4} parent=0 // loop_header_branch
    %12 = sbr.rel (%p10) target = $region8
  $region5: #{net_forward.4} parent=0 // loop_body
    %s14 = ssub.s32 %s9, 1
    %s15 = ssub.s32 %s9, 2
    %s22 = sadd.s32 1, %s17
    %p23 = scmp.ge.s32.totalorder %s22, 4
    %s24 = scalar_select %p23, 0, %s22
    %s25 = sadd.s32 1, %s16
    %s26 = scalar_select %p23, %s25, %s16
    %p27 = scmp.ge.s32.totalorder %s26, 1
    %s28 = scalar_select %p27, 0, %s26
    %s29 = ssub.s32 %s17, %s24
    %s30 = ssub.s32 %s16, %s28
    %s31 = sor.u32 %s29, %s30
    %p32 = scmp.eq.s32.totalorder %s31, 0
    %s34 = sadd.s32 %s33, 1
    %s35 = scalar_select %p32, %s33, %s34
    %p38 = pneg %p32
    %p39 = scmp.eq.s32.totalorder %s9, 3
    %p40 = por %p38, %p39
    %p41 = scmp.ne.s32.totalorder %s33, %s36
    %p42 = scmp.eq.s32.totalorder %s9, 0
    %p43 = por %p41, %p42
    %p44 = scmp.ne.s32.totalorder %s33, %s36
    %p45 = scmp.eq.s32.totalorder %s14, 3
    %p46 = por %p44, %p45
    %p47 = scmp.ne.s32.totalorder %s36, %s37
    %p48 = scmp.eq.s32.totalorder %s14, 0
    %p49 = por %p47, %p48
    %p50 = scmp.ne.s32.totalorder %s36, %s37
    %p51 = scmp.eq.s32.totalorder %s15, 3
    %p52 = por %p50, %p51
    %p54 = scmp.ne.s32.totalorder %s37, %s53
    %p55 = scmp.eq.s32.totalorder %s15, 0
    %p56 = por %p54, %p55
    %s58 = sadd.s32 %s57, 1
    %p61 = scmp.eq.s32.totalorder %s9, 3
    %p62 = scmp.ne.s32.totalorder %s57, %s59
    %p63 = scmp.eq.s32.totalorder %s9, 0
    %p64 = por %p62, %p63
    %p65 = scmp.ne.s32.totalorder %s57, %s59
    %p66 = scmp.eq.s32.totalorder %s14, 3
    %p67 = por %p65, %p66
    %p68 = scmp.ne.s32.totalorder %s59, %s60
    %p69 = scmp.eq.s32.totalorder %s14, 0
    %p70 = por %p68, %p69
    %p71 = scmp.ne.s32.totalorder %s59, %s60
    %p72 = scmp.eq.s32.totalorder %s15, 3
    %p73 = por %p71, %p72
    %p75 = scmp.ne.s32.totalorder %s60, %s74
    %p76 = scmp.eq.s32.totalorder %s15, 0
    %p77 = por %p75, %p76
    %s79 = sadd.s32 %s78, 1
    %p82 = scmp.eq.s32.totalorder %s9, 3
    %p83 = scmp.ne.s32.totalorder %s78, %s80
    %p84 = scmp.eq.s32.totalorder %s9, 0
    %p85 = por %p83, %p84
    %p86 = scmp.ne.s32.totalorder %s78, %s80
    %p87 = scmp.eq.s32.totalorder %s14, 3
    %p88 = por %p86, %p87
    %p89 = scmp.ne.s32.totalorder %s80, %s81
    %p90 = scmp.eq.s32.totalorder %s14, 0
    %p91 = por %p89, %p90
    %p92 = scmp.ne.s32.totalorder %s80, %s81
    %p93 = scmp.eq.s32.totalorder %s15, 3
    %p94 = por %p92, %p93
    %p96 = scmp.ne.s32.totalorder %s81, %s95
    %p97 = scmp.eq.s32.totalorder %s15, 0
    %p98 = por %p96, %p97
    %s99 = ssub.s32 %s16, %s28
    %p100 = scmp.eq.s32.totalorder %s99, 0
    %s102 = sadd.s32 %s101, 1
    %s103 = scalar_select %p100, %s101, %s102
    %p106 = pneg %p100
    %p107 = scmp.eq.s32.totalorder %s9, 3
    %p108 = por %p106, %p107
    %p109 = scmp.ne.s32.totalorder %s101, %s104
    %p110 = scmp.eq.s32.totalorder %s9, 0
    %p111 = por %p109, %p110
    %p112 = scmp.ne.s32.totalorder %s101, %s104
    %p113 = scmp.eq.s32.totalorder %s14, 3
    %p114 = por %p112, %p113
    %p115 = scmp.ne.s32.totalorder %s104, %s105
    %p116 = scmp.eq.s32.totalorder %s14, 0
    %p117 = por %p115, %p116
    %p118 = scmp.ne.s32.totalorder %s104, %s105
    %p119 = scmp.eq.s32.totalorder %s15, 3
    %p120 = por %p118, %p119
    %p122 = scmp.ne.s32.totalorder %s105, %s121
    %p123 = scmp.eq.s32.totalorder %s15, 0
    %p124 = por %p122, %p123
    %p125 = scmp.le.s32.totalorder 1, %s9
    %p126 = scmp.lt.s32.totalorder %s9, 5
    %p127 = pnand %p125, %p126
    %p128 = pneg %p127
    // Predicated region
    $region9: #{net_forward.4} parent=5 // pred_check
      _
    $region10: #{net_forward.4} parent=5 // pred_check_branch
      %130 = sbr.rel (%p127) target = $region12
    $region11: #{net_forward.4} parent=5 // pred_region
      %s131 = ssub.s32 %s9, 1
      // Predicated region
      $region13: #{net_forward.4} parent=11 // pred_check
        %p132 = pneg %p70
      $region14: #{net_forward.4} parent=11 // pred_check_branch
        %134 = sbr.rel (%p132) target = $region16
      $region15: #{net_forward.4} parent=11 // pred_region
        _
      $region16: #{net_forward.4} parent=11 // pred_fallthru
        _
      // Predicated region
      $region17: #{net_forward.4} parent=11 // pred_check
        %p135 = pneg %p91
      $region18: #{net_forward.4} parent=11 // pred_check_branch
        %137 = sbr.rel (%p135) target = $region20
      $region19: #{net_forward.4} parent=11 // pred_region
        _
      $region20: #{net_forward.4} parent=11 // pred_fallthru
        _
    $region12: #{net_forward.4} parent=5 // pred_fallthru
      _
    %p138 = scmp.lt.s32.totalorder %s9, 4
    // Predicated region
    $region21: #{net_forward.4} parent=5 // pred_check
      %p139 = pneg %p138
    $region22: #{net_forward.4} parent=5 // pred_check_branch
      %141 = sbr.rel (%p139) target = $region24
    $region23: #{net_forward.4} parent=5 // pred_region
      // Predicated region
      $region25: #{net_forward.4} parent=23 // pred_check
        %p142 = pneg %p43
      $region26: #{net_forward.4} parent=23 // pred_check_branch
        %144 = sbr.rel (%p142) target = $region28
      $region27: #{net_forward.4} parent=23 // pred_region
        %s145 = smul.u32 8, %s16
        %p146 = scmp.lt.s32.totalorder %s17, 3
        %s147 = scalar_select %p146, %s17, 3
        %p148 = scmp.lt.s32.totalorder %s145, 7
        %s149 = scalar_select %p148, %s145, 7
        %s150 = smul.addr %s149, 2
        %s151 = smul.addr %s147, 16
        %s152 = sadd.s32 %s150, %s151
        %s153 = smul.addr %s152, 4
        %s154 = scalar_lea.vmem %s0, %s153
        %s155 = smul.u32 8, %s16
      $region28: #{net_forward.4} parent=23 // pred_fallthru
        _
    $region24: #{net_forward.4} parent=5 // pred_fallthru
      _
    %p156 = scmp.le.s32.totalorder 1, %s9
    %p157 = scmp.lt.s32.totalorder %s9, 5
    %p158 = pnand %p156, %p157
    %p159 = pneg %p158
    // Predicated region
    $region29: #{net_forward.4} parent=5 // pred_check
      _
    $region30: #{net_forward.4} parent=5 // pred_check_branch
      %161 = sbr.rel (%p158) target = $region32
    $region31: #{net_forward.4} parent=5 // pred_region
      %s162 = ssub.s32 %s9, 1
      %s163 = smul.u32 8, %s18
      %p164 = scmp.lt.s32.totalorder %s19, 3
      %s165 = scalar_select %p164, %s19, 3
      %p166 = scmp.lt.s32.totalorder %s163, 7
      %s167 = scalar_select %p166, %s163, 7
      %s168 = smul.addr %s167, 2
      %s169 = smul.addr %s165, 16
      %s170 = sadd.s32 %s168, %s169
      %s171 = smul.addr %s170, 4
      %s172 = scalar_lea.vmem %s0, %s171
      %p173 = pneg %p49
      %p174 = pneg %p46
      %p175 = pneg %p70
      %p176 = pneg %p67
      %p177 = pneg %p91
      %p178 = pneg %p88
      %p179 = pneg %p117
      %p180 = pneg %p114
      %s181 = smul.u32 8, %s18
      %p182 = scmp.lt.s32.totalorder %s181, 7
      %s183 = scalar_select %p182, %s181, 7
      %s184 = smul.addr %s183, 8
      %s185 = scalar_lea.vmem %s3, %s184
      %s186 = smul.u32 8, %s18
      %p187 = scmp.lt.s32.totalorder %s19, 3
      %s188 = scalar_select %p187, %s19, 3
      %p189 = scmp.lt.s32.totalorder %s186, 7
      %s190 = scalar_select %p189, %s186, 7
      %s191 = smul.addr %s190, 2
      %s192 = smul.addr %s188, 16
      %s193 = sadd.s32 %s191, %s192
      %s194 = smul.addr %s193, 4
      %s195 = scalar_lea.vmem %s0, %s194
      %s196 = smul.u32 8, %s18
      %s197 = smul.u32 8, %s18
      %p198 = scmp.lt.s32.totalorder %s197, 7
      %s199 = scalar_select %p198, %s197, 7
      %s200 = smul.addr %s199, 8
      %s201 = scalar_lea.vmem %s3, %s200
      %s202 = smul.u32 8, %s18
      %v204 = vld [vmem:[%s195] sm:$0xff]
      %v205 = vld [vmem:[%s195 + $0x8] sm:$0xff]
      %v206 = vld [vmem:[%s195 + $0x10] sm:$0xff]
      %v207 = vld [vmem:[%s195 + $0x18] sm:$0xff]
      %v208 = vld [vmem:[%s195 + $0x20] sm:$0xff]
      %v209 = vld [vmem:[%s195 + $0x28] sm:$0xff]
      %v210 = vld [vmem:[%s195 + $0x30] sm:$0xff]
      %v211 = vld [vmem:[%s195 + $0x38] sm:$0xff]
      %v212 = vld [vmem:[%s1] sm:$0xf]
      %v213 = vld [vmem:[%s1 + $0x4] sm:$0xf]
      %v214 = vld [vmem:[%s1 + $0x8] sm:$0xf]
      %v215 = vld [vmem:[%s1 + $0xc] sm:$0xf]
      %v216 = vld [vmem:[%s1 + $0x10] sm:$0xf]
      %v217 = vld [vmem:[%s1 + $0x14] sm:$0xf]
      %v218 = vld [vmem:[%s1 + $0x18] sm:$0xf]
      %v219 = vld [vmem:[%s1 + $0x1c] sm:$0xf]
      %v220 = vld [vmem:[%s1 + $0x20] sm:$0xf]
      %v221 = vld [vmem:[%s1 + $0x24] sm:$0xf]
      %v222 = vld [vmem:[%s1 + $0x28] sm:$0xf]
      %v223 = vld [vmem:[%s1 + $0x2c] sm:$0xf]
      %v224 = vld [vmem:[%s1 + $0x30] sm:$0xf]
      %v225 = vld [vmem:[%s1 + $0x34] sm:$0xf]
      %v226 = vld [vmem:[%s1 + $0x38] sm:$0xf]
      %v227 = vld [vmem:[%s1 + $0x3c] sm:$0xf]
      %v228 = vld [vmem:[%s1 + $0x40] sm:$0xf]
      %v229 = vld [vmem:[%s1 + $0x44] sm:$0xf]
      %v230 = vld [vmem:[%s1 + $0x48] sm:$0x7]
      %v231 = vld [vmem:[%s2] sm:$0x1]
      %v233 = vperm.slane %v231, 0
      %v243 = vunpack.c.l.b16 %v204
      %v244 = vunpack.c.h.b16 %v204
      %v245 = vunpack.c.l.b16 %v205
      %v246 = vunpack.c.h.b16 %v205
      %v247 = vunpack.c.l.b16 %v206
      %v248 = vunpack.c.h.b16 %v206
      %v249 = vunpack.c.l.b16 %v207
      %v250 = vunpack.c.h.b16 %v207
      %v251 = vunpack.c.l.b16 %v208
      %v252 = vunpack.c.h.b16 %v208
      %v253 = vunpack.c.l.b16 %v209
      %v254 = vunpack.c.h.b16 %v209
      %v255 = vunpack.c.l.b16 %v210
      %v256 = vunpack.c.h.b16 %v210
      %v257 = vunpack.c.l.b16 %v211
      %v258 = vunpack.c.h.b16 %v211
      %v259 = vpack.c.b16 %v245, %v243
      %v260 = vpack.c.b16 %v246, %v244
      %v261 = vpack.c.b16 %v249, %v247
      %v262 = vpack.c.b16 %v250, %v248
      %v263 = vpack.c.b16 %v253, %v251
      %v264 = vpack.c.b16 %v254, %v252
      %v265 = vpack.c.b16 %v257, %v255
      %v266 = vpack.c.b16 %v258, %v256
      %v290 = vunpack.c.l.b16 %v212
      %v291 = vunpack.c.l.b16 %v213
      %v292 = vunpack.c.l.b16 %v214
      %v293 = vunpack.c.l.b16 %v215
      %v294 = vunpack.c.l.b16 %v216
      %v295 = vunpack.c.l.b16 %v217
      %v296 = vunpack.c.l.b16 %v218
      %v297 = vunpack.c.l.b16 %v219
      %v298 = vunpack.c.l.b16 %v220
      %v299 = vunpack.c.l.b16 %v221
      %v300 = vunpack.c.l.b16 %v222
      %v301 = vunpack.c.l.b16 %v223
      %v302 = vunpack.c.l.b16 %v224
      %v303 = vunpack.c.l.b16 %v225
      %v304 = vunpack.c.l.b16 %v226
      %v305 = vunpack.c.l.b16 %v227
      %v306 = vunpack.c.l.b16 %v228
      %v307 = vunpack.c.l.b16 %v229
      %v308 = vunpack.c.l.b16 %v230
      %v309 = vpack.c.b16 %v291, %v290
      %v310 = vpack.c.b16 %v293, %v292
      %v311 = vpack.c.b16 %v295, %v294
      %v312 = vpack.c.b16 %v297, %v296
      %v313 = vpack.c.b16 %v299, %v298
      %v314 = vpack.c.b16 %v301, %v300
      %v315 = vpack.c.b16 %v303, %v302
      %v316 = vpack.c.b16 %v305, %v304
      %v317 = vpack.c.b16 %v307, %v306
      %v318 = vpack.c.b16 %v308, %v308
      %vm328 = vcmask 179200
      %v330 = vsel %vm328, %v260, 0
      %v333 = vsel %vm328, %v262, 0
      %v336 = vsel %vm328, %v264, 0
      %v339 = vsel %vm328, %v266, 0
      %vm341 = vcmask 1042432
      %v343 = vsel %vm341, %v318, 0
      %345 = vmatpush.bf16.msra.mxu0 %v316
      %346 = vmatpush.bf16.msra.mxu0 %v315
      %347 = vmatpush.bf16.msra.mxu0 %v314
      %348 = vmatpush.bf16.msra.mxu0 %v313
      %349 = vmatpush.bf16.msra.mxu0 %v312
      %350 = vmatpush.bf16.msra.mxu0 %v311
      %351 = vmatpush.bf16.msra.mxu0 %v310
      %352 = vmatpush.bf16.msra.mxu0 %v309
      %353 = vmatmul.bf16.gmra.mxu0 %v259
      %v354 = vpop.f32.mrf.mxu0
      %v355 = vadd.f32 %v233, %v354
      %v356 = vpop.f32.mrf.mxu0
      %v357 = vadd.f32 %v233, %v356
      %358 = vmatmul.bf16.gmra.mxu0 %v261
      %v359 = vpop.f32.mrf.mxu0
      %v360 = vadd.f32 %v233, %v359
      %v361 = vpop.f32.mrf.mxu0
      %v362 = vadd.f32 %v233, %v361
      %363 = vmatmul.bf16.gmra.mxu0 %v263
      %v364 = vpop.f32.mrf.mxu0
      %v365 = vadd.f32 %v233, %v364
      %v366 = vpop.f32.mrf.mxu0
      %v367 = vadd.f32 %v233, %v366
      %368 = vmatmul.bf16.gmra.mxu0 %v265
      %v369 = vpop.f32.mrf.mxu0
      %v370 = vadd.f32 %v233, %v369
      %v371 = vpop.f32.mrf.mxu0
      %v372 = vadd.f32 %v233, %v371
      %373 = vdwg.mxu0
      %374 = vmatpush.bf16.msra.mxu0 0
      %375 = vmatpush.bf16.msra.mxu0 0
      %376 = vmatpush.bf16.msra.mxu0 0
      %377 = vmatpush.bf16.msra.mxu0 0
      %378 = vmatpush.bf16.msra.mxu0 0
      %379 = vmatpush.bf16.msra.mxu0 0
      %380 = vmatpush.bf16.msra.mxu0 %v343
      %381 = vmatpush.bf16.msra.mxu0 %v317
      %382 = vmatmul.bf16.gmra.mxu0 %v330
      %v383 = vpop.f32.mrf.mxu0
      %v384 = vadd.f32 %v355, %v383
      %v385 = vpop.f32.mrf.mxu0
      %v386 = vadd.f32 %v357, %v385
      %387 = vmatmul.bf16.gmra.mxu0 %v333
      %v388 = vpop.f32.mrf.mxu0
      %v389 = vadd.f32 %v360, %v388
      %v390 = vpop.f32.mrf.mxu0
      %v391 = vadd.f32 %v362, %v390
      %392 = vmatmul.bf16.gmra.mxu0 %v336
      %v393 = vpop.f32.mrf.mxu0
      %v394 = vadd.f32 %v365, %v393
      %v395 = vpop.f32.mrf.mxu0
      %v396 = vadd.f32 %v367, %v395
      %397 = vmatmul.bf16.gmra.mxu0 %v339
      %v398 = vpop.f32.mrf.mxu0
      %v399 = vadd.f32 %v370, %v398
      %v400 = vpop.f32.mrf.mxu0
      %v401 = vadd.f32 %v372, %v400
      %402 = vdwg.mxu0
      %v403 = vmax.f32 %v384, 0.0
      %v404 = vmax.f32 %v386, 0.0
      %v405 = vmax.f32 %v389, 0.0
      %v406 = vmax.f32 %v391, 0.0
      %v407 = vmax.f32 %v394, 0.0
      %v408 = vmax.f32 %v396, 0.0
      %v409 = vmax.f32 %v399, 0.0
      %v410 = vmax.f32 %v401, 0.0
      %p411 = scmp.eq.s32.totalorder %s19, 0
      // Predicated region
      $region33: #{net_forward.4} parent=31 // pred_check
        %p412 = pneg %p411
      $region34: #{net_forward.4} parent=31 // pred_check_branch
        %414 = sbr.rel (%p412) target = $region36
      $region35: #{net_forward.4} parent=31 // pred_region
        %415 = vst [vmem:[%s201] sm:$0xff] %v403
        %416 = vst [vmem:[%s201 + $0x8] sm:$0xff] %v404
        %417 = vst [vmem:[%s201 + $0x10] sm:$0xff] %v405
        %418 = vst [vmem:[%s201 + $0x18] sm:$0xff] %v406
        %419 = vst [vmem:[%s201 + $0x20] sm:$0xff] %v407
        %420 = vst [vmem:[%s201 + $0x28] sm:$0xff] %v408
        %421 = vst [vmem:[%s201 + $0x30] sm:$0xff] %v409
        %422 = vst [vmem:[%s201 + $0x38] sm:$0xff] %v410
      $region36: #{net_forward.4} parent=31 // pred_fallthru
        _
      %p423 = scmp.ne.s32.totalorder %s19, 0
      // Predicated region
      $region37: #{net_forward.4} parent=31 // pred_check
        %p424 = pneg %p423
      $region38: #{net_forward.4} parent=31 // pred_check_branch
        %426 = sbr.rel (%p424) target = $region40
      $region39: #{net_forward.4} parent=31 // pred_region
        %v427 = vld [vmem:[%s201] sm:$0xff]
        %v428 = vld [vmem:[%s201 + $0x8] sm:$0xff]
        %v429 = vld [vmem:[%s201 + $0x10] sm:$0xff]
        %v430 = vld [vmem:[%s201 + $0x18] sm:$0xff]
        %v431 = vld [vmem:[%s201 + $0x20] sm:$0xff]
        %v432 = vld [vmem:[%s201 + $0x28] sm:$0xff]
        %v433 = vld [vmem:[%s201 + $0x30] sm:$0xff]
        %v434 = vld [vmem:[%s201 + $0x38] sm:$0xff]
        %v435 = vmax.f32 %v427, %v403
        %v436 = vmax.f32 %v428, %v404
        %v437 = vmax.f32 %v429, %v405
        %v438 = vmax.f32 %v430, %v406
        %v439 = vmax.f32 %v431, %v407
        %v440 = vmax.f32 %v432, %v408
        %v441 = vmax.f32 %v433, %v409
        %v442 = vmax.f32 %v434, %v410
        %443 = vst [vmem:[%s201] sm:$0xff] %v435
        %444 = vst [vmem:[%s201 + $0x8] sm:$0xff] %v436
        %445 = vst [vmem:[%s201 + $0x10] sm:$0xff] %v437
        %446 = vst [vmem:[%s201 + $0x18] sm:$0xff] %v438
        %447 = vst [vmem:[%s201 + $0x20] sm:$0xff] %v439
        %448 = vst [vmem:[%s201 + $0x28] sm:$0xff] %v440
        %449 = vst [vmem:[%s201 + $0x30] sm:$0xff] %v441
        %450 = vst [vmem:[%s201 + $0x38] sm:$0xff] %v442
      $region40: #{net_forward.4} parent=31 // pred_fallthru
        _
      %s451 = smul.u32 8, %s18
      %p452 = scmp.lt.s32.totalorder %s451, 7
      %s453 = scalar_select %p452, %s451, 7
      %s454 = smul.addr %s453, 8
      %s455 = scalar_lea.vmem %s3, %s454
      // Predicated region
      $region41: #{net_forward.4} parent=31 // pred_check
        %p456 = pneg %p114
      $region42: #{net_forward.4} parent=31 // pred_check_branch
        %458 = sbr.rel (%p456) target = $region44
      $region43: #{net_forward.4} parent=31 // pred_region
        %s459 = smul.u32 8, %s18
      $region44: #{net_forward.4} parent=31 // pred_fallthru
        _
      // Predicated region
      $region45: #{net_forward.4} parent=31 // pred_check
        %p460 = pneg %p114
      $region46: #{net_forward.4} parent=31 // pred_check_branch
        %462 = sbr.rel (%p460) target = $region48
      $region47: #{net_forward.4} parent=31 // pred_region
        %s463 = smul.u32 8, %s18
        %p464 = scmp.lt.s32.totalorder %s463, 7
        %s465 = scalar_select %p464, %s463, 7
        %s466 = smul.addr %s465, 8
        %s467 = scalar_lea.vmem %s3, %s466
      $region48: #{net_forward.4} parent=31 // pred_fallthru
        _
    $region32: #{net_forward.4} parent=5 // pred_fallthru
      _
    %p468 = scmp.le.s32.totalorder 2, %s9
    // Predicated region
    $region49: #{net_forward.4} parent=5 // pred_check
      %p469 = pneg %p468
    $region50: #{net_forward.4} parent=5 // pred_check_branch
      %471 = sbr.rel (%p469) target = $region52
    $region51: #{net_forward.4} parent=5 // pred_region
      %s472 = ssub.s32 %s9, 2
    $region52: #{net_forward.4} parent=5 // pred_fallthru
      _
  $region6: #{net_forward.4} parent=0 // loop_footer
    %s13 = sadd.s32 1, %s9
  $region7: #{net_forward.4} parent=0 // loop_footer_branch
    %8 = sbr.rel target = $region3
  $region8: #{net_forward.4} parent=0 // loop_exit
    _

// kernel: net_forward.5
$region0: #{net_forward.5}
  #allocation0 [shape = 'u32[]', space=smem, size = 0x4, offset = 0x4, fixed_abs, tag = 'smem constant byte address 0x4 - core index']
  #allocation1 [shape = 'u32[72,128]{1,0:T(1,128)}', space=vmem, size = 0x9000, scoped, tag = 'internal scratch']
  %s0 = inlined_call_operand.vmem [shape: bf16[16,400], index: 0, kind: input, shape index: {}]
  %s1 = inlined_call_operand.vmem [shape: bf16[400,128], index: 1, kind: input, shape index: {}]
  %s2 = inlined_call_operand.vmem [shape: f32[1,128], index: 2, kind: input, shape index: {}]
  %s3 = inlined_call_operand.vmem [shape: bf16[128,128], index: 3, kind: input, shape index: {}]
  %s4 = inlined_call_operand.vmem [shape: f32[1,128], index: 4, kind: input, shape index: {}]
  %s5 = inlined_call_operand.vmem [shape: bf16[128,128], index: 5, kind: input, shape index: {}]
  %s6 = inlined_call_operand.vmem [shape: f32[1,128], index: 6, kind: input, shape index: {}]
  %s7 = inlined_call_operand.vmem [shape: f32[16,128], index: 7, kind: output, shape index: {}]
  %s8 = sld [smem:[#allocation0]]
  $region38: #{net_forward.5} parent=0
    _
  %s10 = ssub.s32 1, %s8
  %s11 = scalar_select 0, %s10, %s8
  // Predicated region
  $region2: #{net_forward.5} parent=0 // pred_check
    _
  $region3: #{net_forward.5} parent=0 // pred_check_branch
    %13 = sbr.rel (0) target = $region5
  $region4: #{net_forward.5} parent=0 // pred_region
    _
  $region5: #{net_forward.5} parent=0 // pred_fallthru
    _
  // Predicated region
  $region6: #{net_forward.5} parent=0 // pred_check
    _
  $region7: #{net_forward.5} parent=0 // pred_check_branch
    %15 = sbr.rel (0) target = $region9
  $region8: #{net_forward.5} parent=0 // pred_region
    _
  $region9: #{net_forward.5} parent=0 // pred_fallthru
    _
  // Predicated region
  $region10: #{net_forward.5} parent=0 // pred_check
    _
  $region11: #{net_forward.5} parent=0 // pred_check_branch
    %17 = sbr.rel (0) target = $region13
  $region12: #{net_forward.5} parent=0 // pred_region
    _
  $region13: #{net_forward.5} parent=0 // pred_fallthru
    _
  // Predicated region
  $region14: #{net_forward.5} parent=0 // pred_check
    _
  $region15: #{net_forward.5} parent=0 // pred_check_branch
    %19 = sbr.rel (0) target = $region17
  $region16: #{net_forward.5} parent=0 // pred_region
    _
  $region17: #{net_forward.5} parent=0 // pred_fallthru
    _
  // Predicated region
  $region18: #{net_forward.5} parent=0 // pred_check
    _
  $region19: #{net_forward.5} parent=0 // pred_check_branch
    %21 = sbr.rel (0) target = $region21
  $region20: #{net_forward.5} parent=0 // pred_region
    _
  $region21: #{net_forward.5} parent=0 // pred_fallthru
    _
  // Predicated region
  $region22: #{net_forward.5} parent=0 // pred_check
    _
  $region23: #{net_forward.5} parent=0 // pred_check_branch
    %23 = sbr.rel (0) target = $region25
  $region24: #{net_forward.5} parent=0 // pred_region
    _
  $region25: #{net_forward.5} parent=0 // pred_fallthru
    _
  // Predicated region
  $region26: #{net_forward.5} parent=0 // pred_check
    _
  $region27: #{net_forward.5} parent=0 // pred_check_branch
    %25 = sbr.rel (0) target = $region29
  $region28: #{net_forward.5} parent=0 // pred_region
    _
  $region29: #{net_forward.5} parent=0 // pred_fallthru
    _
  %v27 = vld [vmem:[%s0] sm:$0xff]
  %v28 = vld [vmem:[%s0 + $0x8] sm:$0xff]
  %v29 = vld [vmem:[%s0 + $0x10] sm:$0xff]
  %v30 = vld [vmem:[%s0 + $0x18] sm:$0xff]
  %v31 = vld [vmem:[%s1] sm:$0xf]
  %v32 = vld [vmem:[%s1 + $0x4] sm:$0xf]
  %v33 = vld [vmem:[%s1 + $0x8] sm:$0xf]
  %v34 = vld [vmem:[%s1 + $0xc] sm:$0xf]
  %v35 = vld [vmem:[%s1 + $0x10] sm:$0xf]
  %v36 = vld [vmem:[%s1 + $0x14] sm:$0xf]
  %v37 = vld [vmem:[%s1 + $0x18] sm:$0xf]
  %v38 = vld [vmem:[%s1 + $0x1c] sm:$0xf]
  %v39 = vld [vmem:[%s1 + $0x20] sm:$0xf]
  %v40 = vld [vmem:[%s1 + $0x24] sm:$0xf]
  %v41 = vld [vmem:[%s1 + $0x28] sm:$0xf]
  %v42 = vld [vmem:[%s1 + $0x2c] sm:$0xf]
  %v43 = vld [vmem:[%s1 + $0x30] sm:$0xf]
  %v44 = vld [vmem:[%s1 + $0x34] sm:$0xf]
  %v45 = vld [vmem:[%s1 + $0x38] sm:$0xf]
  %v46 = vld [vmem:[%s1 + $0x3c] sm:$0xf]
  %v47 = vld [vmem:[%s1 + $0x40] sm:$0xf]
  %v48 = vld [vmem:[%s1 + $0x44] sm:$0xf]
  %v49 = vld [vmem:[%s1 + $0x48] sm:$0xf]
  %v50 = vld [vmem:[%s1 + $0x4c] sm:$0xf]
  %v51 = vld [vmem:[%s1 + $0x50] sm:$0xf]
  %v52 = vld [vmem:[%s1 + $0x54] sm:$0xf]
  %v53 = vld [vmem:[%s1 + $0x58] sm:$0xf]
  %v54 = vld [vmem:[%s1 + $0x5c] sm:$0xf]
  %v55 = vld [vmem:[%s1 + $0x60] sm:$0xf]
  %v56 = vld [vmem:[%s1 + $0x64] sm:$0xf]
  %v57 = vld [vmem:[%s1 + $0x68] sm:$0xf]
  %v58 = vld [vmem:[%s1 + $0x6c] sm:$0xf]
  %v59 = vld [vmem:[%s1 + $0x70] sm:$0xf]
  %v60 = vld [vmem:[%s1 + $0x74] sm:$0xf]
  %v61 = vld [vmem:[%s1 + $0x78] sm:$0xf]
  %v62 = vld [vmem:[%s1 + $0x7c] sm:$0xf]
  %v63 = vld [vmem:[%s1 + $0x80] sm:$0xf]
  %v64 = vld [vmem:[%s1 + $0x84] sm:$0xf]
  %v65 = vld [vmem:[%s1 + $0x88] sm:$0xf]
  %v66 = vld [vmem:[%s1 + $0x8c] sm:$0xf]
  %v67 = vld [vmem:[%s1 + $0x90] sm:$0xf]
  %v68 = vld [vmem:[%s1 + $0x94] sm:$0xf]
  %v69 = vld [vmem:[%s1 + $0x98] sm:$0xf]
  %v70 = vld [vmem:[%s1 + $0x9c] sm:$0xf]
  %v71 = vld [vmem:[%s1 + $0xa0] sm:$0xf]
  %v72 = vld [vmem:[%s1 + $0xa4] sm:$0xf]
  %v73 = vld [vmem:[%s1 + $0xa8] sm:$0xf]
  %v74 = vld [vmem:[%s1 + $0xac] sm:$0xf]
  %v75 = vld [vmem:[%s1 + $0xb0] sm:$0xf]
  %v76 = vld [vmem:[%s1 + $0xb4] sm:$0xf]
  %v77 = vld [vmem:[%s1 + $0xb8] sm:$0xf]
  %v78 = vld [vmem:[%s1 + $0xbc] sm:$0xf]
  %v79 = vld [vmem:[%s1 + $0xc0] sm:$0xf]
  %v80 = vld [vmem:[%s1 + $0xc4] sm:$0xf]
  %v81 = vld [vmem:[%s2] sm:$0x1]
  %v83 = vperm.slane %v81, 0
  %v89 = vunpack.c.l.b16 %v27
  %v90 = vunpack.c.h.b16 %v27
  %v91 = vunpack.c.l.b16 %v28
  %v92 = vunpack.c.h.b16 %v28
  %v93 = vunpack.c.l.b16 %v29
  %v94 = vunpack.c.h.b16 %v29
  %v95 = vunpack.c.l.b16 %v30
  %v96 = vunpack.c.h.b16 %v30
  %v97 = vpack.c.b16 %v93, %v89
  %v98 = vpack.c.b16 %v94, %v90
  %v99 = vpack.c.b16 %v95, %v91
  %v100 = vpack.c.b16 %v96, %v92
  %v154 = vunpack.c.l.b16 %v31
  %v155 = vunpack.c.l.b16 %v32
  %v156 = vunpack.c.l.b16 %v33
  %v157 = vunpack.c.l.b16 %v34
  %v158 = vunpack.c.l.b16 %v35
  %v159 = vunpack.c.l.b16 %v36
  %v160 = vunpack.c.l.b16 %v37
  %v161 = vunpack.c.l.b16 %v38
  %v162 = vunpack.c.l.b16 %v39
  %v163 = vunpack.c.l.b16 %v40
  %v164 = vunpack.c.l.b16 %v41
  %v165 = vunpack.c.l.b16 %v42
  %v166 = vunpack.c.l.b16 %v43
  %v167 = vunpack.c.l.b16 %v44
  %v168 = vunpack.c.l.b16 %v45
  %v169 = vunpack.c.l.b16 %v46
  %v170 = vunpack.c.l.b16 %v47
  %v171 = vunpack.c.l.b16 %v48
  %v172 = vunpack.c.l.b16 %v49
  %v173 = vunpack.c.l.b16 %v50
  %v174 = vunpack.c.l.b16 %v51
  %v175 = vunpack.c.l.b16 %v52
  %v176 = vunpack.c.l.b16 %v53
  %v177 = vunpack.c.l.b16 %v54
  %v178 = vunpack.c.l.b16 %v55
  %v179 = vunpack.c.l.b16 %v56
  %v180 = vunpack.c.l.b16 %v57
  %v181 = vunpack.c.l.b16 %v58
  %v182 = vunpack.c.l.b16 %v59
  %v183 = vunpack.c.l.b16 %v60
  %v184 = vunpack.c.l.b16 %v61
  %v185 = vunpack.c.l.b16 %v62
  %v186 = vunpack.c.l.b16 %v63
  %v187 = vunpack.c.l.b16 %v64
  %v188 = vunpack.c.l.b16 %v65
  %v189 = vunpack.c.l.b16 %v66
  %v190 = vunpack.c.l.b16 %v67
  %v191 = vunpack.c.l.b16 %v68
  %v192 = vunpack.c.l.b16 %v69
  %v193 = vunpack.c.l.b16 %v70
  %v194 = vunpack.c.l.b16 %v71
  %v195 = vunpack.c.l.b16 %v72
  %v196 = vunpack.c.l.b16 %v73
  %v197 = vunpack.c.l.b16 %v74
  %v198 = vunpack.c.l.b16 %v75
  %v199 = vunpack.c.l.b16 %v76
  %v200 = vunpack.c.l.b16 %v77
  %v201 = vunpack.c.l.b16 %v78
  %v202 = vunpack.c.l.b16 %v79
  %v203 = vunpack.c.l.b16 %v80
  %v204 = vpack.c.b16 %v155, %v154
  %v205 = vpack.c.b16 %v157, %v156
  %v206 = vpack.c.b16 %v159, %v158
  %v207 = vpack.c.b16 %v161, %v160
  %v208 = vpack.c.b16 %v163, %v162
  %v209 = vpack.c.b16 %v165, %v164
  %v210 = vpack.c.b16 %v167, %v166
  %v211 = vpack.c.b16 %v169, %v168
  %v212 = vpack.c.b16 %v171, %v170
  %v213 = vpack.c.b16 %v173, %v172
  %v214 = vpack.c.b16 %v175, %v174
  %v215 = vpack.c.b16 %v177, %v176
  %v216 = vpack.c.b16 %v179, %v178
  %v217 = vpack.c.b16 %v181, %v180
  %v218 = vpack.c.b16 %v183, %v182
  %v219 = vpack.c.b16 %v185, %v184
  %v220 = vpack.c.b16 %v187, %v186
  %v221 = vpack.c.b16 %v189, %v188
  %v222 = vpack.c.b16 %v191, %v190
  %v223 = vpack.c.b16 %v193, %v192
  %v224 = vpack.c.b16 %v195, %v194
  %v225 = vpack.c.b16 %v197, %v196
  %v226 = vpack.c.b16 %v199, %v198
  %v227 = vpack.c.b16 %v201, %v200
  %v228 = vpack.c.b16 %v203, %v202
  %vm254 = vcmask 130048
  %v256 = vsel %vm254, %v100, 0
  %258 = vmatpush.bf16.msra.mxu0 %v211
  %259 = vmatpush.bf16.msra.mxu0 %v210
  %260 = vmatpush.bf16.msra.mxu0 %v209
  %261 = vmatpush.bf16.msra.mxu0 %v208
  %262 = vmatpush.bf16.msra.mxu0 %v207
  %263 = vmatpush.bf16.msra.mxu0 %v206
  %264 = vmatpush.bf16.msra.mxu0 %v205
  %265 = vmatpush.bf16.msra.mxu0 %v204
  %266 = vmatmul.bf16.gmra.mxu0 %v97
  %v267 = vpop.f32.mrf.mxu0
  %v268 = vadd.f32 %v83, %v267
  %v269 = vpop.f32.mrf.mxu0
  %v270 = vadd.f32 %v83, %v269
  %271 = vdwg.mxu0
  %272 = vmatpush.bf16.msra.mxu0 %v219
  %273 = vmatpush.bf16.msra.mxu0 %v218
  %274 = vmatpush.bf16.msra.mxu0 %v217
  %275 = vmatpush.bf16.msra.mxu0 %v216
  %276 = vmatpush.bf16.msra.mxu0 %v215
  %277 = vmatpush.bf16.msra.mxu0 %v214
  %278 = vmatpush.bf16.msra.mxu0 %v213
  %279 = vmatpush.bf16.msra.mxu0 %v212
  %280 = vmatmul.bf16.gmra.mxu0 %v98
  %v281 = vpop.f32.mrf.mxu0
  %v282 = vadd.f32 %v268, %v281
  %v283 = vpop.f32.mrf.mxu0
  %v284 = vadd.f32 %v270, %v283
  %285 = vdwg.mxu0
  %286 = vmatpush.bf16.msra.mxu0 %v227
  %287 = vmatpush.bf16.msra.mxu0 %v226
  %288 = vmatpush.bf16.msra.mxu0 %v225
  %289 = vmatpush.bf16.msra.mxu0 %v224
  %290 = vmatpush.bf16.msra.mxu0 %v223
  %291 = vmatpush.bf16.msra.mxu0 %v222
  %292 = vmatpush.bf16.msra.mxu0 %v221
  %293 = vmatpush.bf16.msra.mxu0 %v220
  %294 = vmatmul.bf16.gmra.mxu0 %v99
  %v295 = vpop.f32.mrf.mxu0
  %v296 = vadd.f32 %v282, %v295
  %v297 = vpop.f32.mrf.mxu0
  %v298 = vadd.f32 %v284, %v297
  %299 = vdwg.mxu0
  %300 = vmatpush.bf16.msra.mxu0 0
  %301 = vmatpush.bf16.msra.mxu0 0
  %302 = vmatpush.bf16.msra.mxu0 0
  %303 = vmatpush.bf16.msra.mxu0 0
  %304 = vmatpush.bf16.msra.mxu0 0
  %305 = vmatpush.bf16.msra.mxu0 0
  %306 = vmatpush.bf16.msra.mxu0 0
  %307 = vmatpush.bf16.msra.mxu0 %v228
  %308 = vmatmul.bf16.gmra.mxu0 %v256
  %v309 = vpop.f32.mrf.mxu0
  %v310 = vadd.f32 %v296, %v309
  %v311 = vpop.f32.mrf.mxu0
  %v312 = vadd.f32 %v298, %v311
  %313 = vdwg.mxu0
  %v314 = vmax.f32 %v310, 0.0
  %v315 = vmax.f32 %v312, 0.0
  %v316 = vpack.c.bf16 %v315, %v314
  %v317 = vld [vmem:[%s3] sm:$0xf]
  %v318 = vld [vmem:[%s3 + $0x4] sm:$0xf]
  %v319 = vld [vmem:[%s3 + $0x8] sm:$0xf]
  %v320 = vld [vmem:[%s3 + $0xc] sm:$0xf]
  %v321 = vld [vmem:[%s3 + $0x10] sm:$0xf]
  %v322 = vld [vmem:[%s3 + $0x14] sm:$0xf]
  %v323 = vld [vmem:[%s3 + $0x18] sm:$0xf]
  %v324 = vld [vmem:[%s3 + $0x1c] sm:$0xf]
  %v325 = vld [vmem:[%s3 + $0x20] sm:$0xf]
  %v326 = vld [vmem:[%s3 + $0x24] sm:$0xf]
  %v327 = vld [vmem:[%s3 + $0x28] sm:$0xf]
  %v328 = vld [vmem:[%s3 + $0x2c] sm:$0xf]
  %v329 = vld [vmem:[%s3 + $0x30] sm:$0xf]
  %v330 = vld [vmem:[%s3 + $0x34] sm:$0xf]
  %v331 = vld [vmem:[%s3 + $0x38] sm:$0xf]
  %v332 = vld [vmem:[%s3 + $0x3c] sm:$0xf]
  %v333 = vld [vmem:[%s4] sm:$0x1]
  %v335 = vperm.slane %v333, 0
  %v353 = vunpack.c.l.b16 %v317
  %v354 = vunpack.c.l.b16 %v318
  %v355 = vunpack.c.l.b16 %v319
  %v356 = vunpack.c.l.b16 %v320
  %v357 = vunpack.c.l.b16 %v321
  %v358 = vunpack.c.l.b16 %v322
  %v359 = vunpack.c.l.b16 %v323
  %v360 = vunpack.c.l.b16 %v324
  %v361 = vunpack.c.l.b16 %v325
  %v362 = vunpack.c.l.b16 %v326
  %v363 = vunpack.c.l.b16 %v327
  %v364 = vunpack.c.l.b16 %v328
  %v365 = vunpack.c.l.b16 %v329
  %v366 = vunpack.c.l.b16 %v330
  %v367 = vunpack.c.l.b16 %v331
  %v368 = vunpack.c.l.b16 %v332
  %v369 = vpack.c.b16 %v354, %v353
  %v370 = vpack.c.b16 %v356, %v355
  %v371 = vpack.c.b16 %v358, %v357
  %v372 = vpack.c.b16 %v360, %v359
  %v373 = vpack.c.b16 %v362, %v361
  %v374 = vpack.c.b16 %v364, %v363
  %v375 = vpack.c.b16 %v366, %v365
  %v376 = vpack.c.b16 %v368, %v367
  %385 = vmatpush.bf16.msra.mxu0 %v376
  %386 = vmatpush.bf16.msra.mxu0 %v375
  %387 = vmatpush.bf16.msra.mxu0 %v374
  %388 = vmatpush.bf16.msra.mxu0 %v373
  %389 = vmatpush.bf16.msra.mxu0 %v372
  %390 = vmatpush.bf16.msra.mxu0 %v371
  %391 = vmatpush.bf16.msra.mxu0 %v370
  %392 = vmatpush.bf16.msra.mxu0 %v369
  %393 = vmatmul.bf16.gmra.mxu0 %v316
  %v394 = vpop.f32.mrf.mxu0
  %v395 = vadd.f32 %v335, %v394
  %v396 = vpop.f32.mrf.mxu0
  %v397 = vadd.f32 %v335, %v396
  %398 = vdwg.mxu0
  %v399 = vmax.f32 %v395, 0.0
  %v400 = vmax.f32 %v397, 0.0
  %v401 = vpack.c.bf16 %v400, %v399
  %v402 = vld [vmem:[%s5] sm:$0xf]
  %v403 = vld [vmem:[%s5 + $0x4] sm:$0xf]
  %v404 = vld [vmem:[%s5 + $0x8] sm:$0xf]
  %v405 = vld [vmem:[%s5 + $0xc] sm:$0xf]
  %v406 = vld [vmem:[%s5 + $0x10] sm:$0xf]
  %v407 = vld [vmem:[%s5 + $0x14] sm:$0xf]
  %v408 = vld [vmem:[%s5 + $0x18] sm:$0xf]
  %v409 = vld [vmem:[%s5 + $0x1c] sm:$0xf]
  %v410 = vld [vmem:[%s5 + $0x20] sm:$0xf]
  %v411 = vld [vmem:[%s5 + $0x24] sm:$0xf]
  %v412 = vld [vmem:[%s5 + $0x28] sm:$0xf]
  %v413 = vld [vmem:[%s5 + $0x2c] sm:$0xf]
  %v414 = vld [vmem:[%s5 + $0x30] sm:$0xf]
  %v415 = vld [vmem:[%s5 + $0x34] sm:$0xf]
  %v416 = vld [vmem:[%s5 + $0x38] sm:$0xf]
  %v417 = vld [vmem:[%s5 + $0x3c] sm:$0xf]
  %v418 = vld [vmem:[%s6] sm:$0x1]
  %v420 = vperm.slane %v418, 0
  %v438 = vunpack.c.l.b16 %v402
  %v439 = vunpack.c.l.b16 %v403
  %v440 = vunpack.c.l.b16 %v404
  %v441 = vunpack.c.l.b16 %v405
  %v442 = vunpack.c.l.b16 %v406
  %v443 = vunpack.c.l.b16 %v407
  %v444 = vunpack.c.l.b16 %v408
  %v445 = vunpack.c.l.b16 %v409
  %v446 = vunpack.c.l.b16 %v410
  %v447 = vunpack.c.l.b16 %v411
  %v448 = vunpack.c.l.b16 %v412
  %v449 = vunpack.c.l.b16 %v413
  %v450 = vunpack.c.l.b16 %v414
  %v451 = vunpack.c.l.b16 %v415
  %v452 = vunpack.c.l.b16 %v416
  %v453 = vunpack.c.l.b16 %v417
  %v454 = vpack.c.b16 %v439, %v438
  %v455 = vpack.c.b16 %v441, %v440
  %v456 = vpack.c.b16 %v443, %v442
  %v457 = vpack.c.b16 %v445, %v444
  %v458 = vpack.c.b16 %v447, %v446
  %v459 = vpack.c.b16 %v449, %v448
  %v460 = vpack.c.b16 %v451, %v450
  %v461 = vpack.c.b16 %v453, %v452
  %470 = vmatpush.bf16.msra.mxu0 %v461
  %471 = vmatpush.bf16.msra.mxu0 %v460
  %472 = vmatpush.bf16.msra.mxu0 %v459
  %473 = vmatpush.bf16.msra.mxu0 %v458
  %474 = vmatpush.bf16.msra.mxu0 %v457
  %475 = vmatpush.bf16.msra.mxu0 %v456
  %476 = vmatpush.bf16.msra.mxu0 %v455
  %477 = vmatpush.bf16.msra.mxu0 %v454
  %478 = vmatmul.bf16.gmra.mxu0 %v401
  %v479 = vpop.f32.mrf.mxu0
  %v480 = vadd.f32 %v420, %v479
  %v481 = vpop.f32.mrf.mxu0
  %v482 = vadd.f32 %v420, %v481
  %483 = vdwg.mxu0
  %484 = vst [vmem:[%s7] sm:$0xff] %v480
  %485 = vst [vmem:[%s7 + $0x8] sm:$0xff] %v482
  // Predicated region
  $region30: #{net_forward.5} parent=0 // pred_check
    _
  $region31: #{net_forward.5} parent=0 // pred_check_branch
    %487 = sbr.rel (0) target = $region33
  $region32: #{net_forward.5} parent=0 // pred_region
    _
  $region33: #{net_forward.5} parent=0 // pred_fallthru
    _
  // Predicated region
  $region34: #{net_forward.5} parent=0 // pred_check
    _
  $region35: #{net_forward.5} parent=0 // pred_check_branch
    %489 = sbr.rel (0) target = $region37
  $region36: #{net_forward.5} parent=0 // pred_region
    _
  $region37: #{net_forward.5} parent=0 // pred_fallthru
    _

</llo_original>
